<compile_context>
chip_gen: v7x
topology: tpu7x:2x2x1
jax: 0.10.0
libtpu: 0.0.40
codegen_flags: <defaults>
</compile_context>

<pallas_src>
import numpy as np
import jax
import jax.numpy as jnp
from jax.experimental import pallas as pl
from jax.experimental.pallas import tpu as pltpu

# ---- static shapes implied by the module ----
K1, K2 = 2, 2
C_IN, C1, C2 = 1, 64, 32
H_IN = W_IN = 6
H1S = W1S = H_IN - K1 + 1        # 5
H2S = W2S = H1S - K2 + 1         # 4
P1 = H1S * W1S                   # 25 conv1 output positions
P2 = H2S * W2S                   # 16 conv2 output positions
FC1_IN = C2 * P2                 # 512
FC1_OUT, FC2_OUT, FC3_OUT = 128, 64, 1
OUT_PAD = 128                    # lane-dense padded output width


def _vmem_spec():
    return pl.BlockSpec(memory_space=pltpu.MemorySpace.VMEM)


# -------------------- fused Pallas kernel --------------------

def cnn_kernel(x_ref, st_ref, w1_ref, b1_ref, w2_ref, b2_ref, gt_ref,
               wfc1_ref, bfc1_ref, wfc2_ref, bfc2_ref, wfc3_ref, bfc3_ref, o_ref):
    x_row = x_ref[...]                                            # (1, 36) f32 (row-major 6x6)

    # ---- conv1 + relu1 (do1 = identity); layout: (channel, position) = (64, 25) ----
    h1 = jnp.zeros((C1, P1), jnp.float32)
    for off in range(K1 * K1):
        # gather the shifted 5x5 window of the input as a (1, 25) row (constant 0/1 matmul)
        gx = jnp.dot(x_row, st_ref[off], preferred_element_type=jnp.float32)     # (1, 25)
        h1 = h1 + w1_ref[off] * gx                                # (64,1)*(1,25) -> (64, 25)
    h1 = jnp.maximum(h1 + b1_ref[...], 0.0)                       # (64, 25)

    # ---- conv2 + relu2 (do2 = identity): stacked-weight matmul + 4 spatial-gather matmuls ----
    u = jnp.dot(w2_ref[...], h1.astype(jnp.bfloat16),
                preferred_element_type=jnp.float32)               # (128, 25): rows = off*32 + c2
    h2 = jnp.zeros((C2, P2), jnp.float32)
    for off in range(K2 * K2):
        h2 = h2 + jnp.dot(u[off * C2:(off + 1) * C2, :], gt_ref[off],
                          preferred_element_type=jnp.float32)     # (32, 16)
    h2 = jnp.maximum(h2 + b2_ref[...], 0.0)                       # (32, 16) = (channel, oh*4+ow)

    # ---- flatten to (1, 512) in torch's NCHW .view order: flat[c*16 + p] = h2[c, p] ----
    # replicate h2 along lanes (h2rep[c, j] = h2[c, j % 16]) via a 0/1 matmul, then mask+sum rows.
    lane_r = jax.lax.broadcasted_iota(jnp.int32, (P2, FC1_IN), 1)
    sub_r = jax.lax.broadcasted_iota(jnp.int32, (P2, FC1_IN), 0)
    rep = jnp.where((lane_r & (P2 - 1)) == sub_r, 1.0, 0.0)       # (16, 512)
    h2rep = jnp.dot(h2, rep, preferred_element_type=jnp.float32)  # (32, 512)
    lane_p = jax.lax.broadcasted_iota(jnp.int32, (C2, FC1_IN), 1)
    sub_p = jax.lax.broadcasted_iota(jnp.int32, (C2, FC1_IN), 0)
    lo = sub_p * P2
    pick = (lane_p >= lo) & (lane_p < lo + P2)                    # pick[c, j] = (j // 16 == c)
    flat = jnp.sum(jnp.where(pick, h2rep, 0.0), axis=0, keepdims=True)   # (1, 512)

    # ---- fc1 + relu (do3 = identity) ----
    h3 = jnp.dot(flat.astype(jnp.bfloat16), wfc1_ref[...],
                 preferred_element_type=jnp.float32) + bfc1_ref[...]
    h3 = jnp.maximum(h3, 0.0)                                     # (1, 128)

    # ---- fc2 + relu (do4 = identity) ----
    h4 = jnp.dot(h3.astype(jnp.bfloat16), wfc2_ref[...],
                 preferred_element_type=jnp.float32) + bfc2_ref[...]
    h4 = jnp.maximum(h4, 0.0)                                     # (1, 64)

    # ---- fc3: lane-dense (1, 128) store; real output lives in column 0 ----
    o_ref[...] = jnp.dot(h4.astype(jnp.bfloat16), wfc3_ref[...],
                         preferred_element_type=jnp.float32) + bfc3_ref[...]


# -------------------- parameter packing --------------------

def init_params(key):
    ks = jax.random.split(key, 10)
    # torch layouts: conv weight (out_c, in_c, kh, kw), linear weight (out, in)
    w1 = jax.random.normal(ks[0], (C1, C_IN, K1, K1), jnp.float32) * 0.1
    b1 = jax.random.normal(ks[1], (C1,), jnp.float32) * 0.1
    w2 = jax.random.normal(ks[2], (C2, C1, K2, K2), jnp.float32) * 0.05
    b2 = jax.random.normal(ks[3], (C2,), jnp.float32) * 0.1
    wfc1 = jax.random.normal(ks[4], (FC1_OUT, FC1_IN), jnp.float32) * 0.05
    bfc1 = jax.random.normal(ks[5], (FC1_OUT,), jnp.float32) * 0.1
    wfc2 = jax.random.normal(ks[6], (FC2_OUT, FC1_OUT), jnp.float32) * 0.05
    bfc2 = jax.random.normal(ks[7], (FC2_OUT,), jnp.float32) * 0.1
    wfc3 = jax.random.normal(ks[8], (FC3_OUT, FC2_OUT), jnp.float32) * 0.05
    bfc3 = jax.random.normal(ks[9], (FC3_OUT,), jnp.float32) * 0.1

    offsets = [(dh, dw) for dh in range(K1) for dw in range(K1)]   # off = dh*2 + dw

    # conv1: in-kernel im2col gather matrices (36, 25) per offset + per-offset weight columns
    sT = np.zeros((K1 * K1, H_IN * W_IN, P1), np.float32)
    for o, (dh, dw) in enumerate(offsets):
        for oh in range(H1S):
            for ow in range(W1S):
                sT[o, (oh + dh) * W_IN + (ow + dw), oh * W1S + ow] = 1.0
    w1c = jnp.transpose(w1.reshape(C1, K1 * K1), (1, 0))[:, :, None]         # (4, 64, 1)

    # conv2: stacked transposed weights (4*32, 64) and 0/1 spatial-gather matrices (25, 16)
    w2t = jnp.concatenate([w2[:, :, dh, dw] for (dh, dw) in offsets], axis=0)  # (128, 64)
    gT = np.zeros((K2 * K2, P1, P2), np.float32)
    for o, (dh, dw) in enumerate(offsets):
        for oh in range(H2S):
            for ow in range(W2S):
                gT[o, (oh + dh) * W1S + (ow + dw), oh * W2S + ow] = 1.0

    # fc3 padded to 128 output lanes for a lane-dense store
    wfc3p = jnp.zeros((FC2_OUT, OUT_PAD), jnp.float32).at[:, 0].set(wfc3[0])
    bfc3p = jnp.zeros((1, OUT_PAD), jnp.float32).at[0, 0].set(bfc3[0])

    params = dict(
        sT=jnp.asarray(sT), w1c=w1c, b1=b1.reshape(C1, 1),
        w2t=w2t.astype(jnp.bfloat16), b2=b2.reshape(C2, 1), gT=jnp.asarray(gT),
        wfc1=wfc1.T.astype(jnp.bfloat16), bfc1=bfc1.reshape(1, FC1_OUT),
        wfc2=wfc2.T.astype(jnp.bfloat16), bfc2=bfc2.reshape(1, FC2_OUT),
        wfc3=wfc3p.astype(jnp.bfloat16), bfc3=bfc3p,
    )

    # reference params (torch layout), with the same bf16 weight quantization the kernel uses
    q = lambda a: a.astype(jnp.bfloat16).astype(jnp.float32)
    ref = dict(w1=w1, b1=b1, w2=q(w2), b2=b2, wfc1=q(wfc1), bfc1=bfc1,
               wfc2=q(wfc2), bfc2=bfc2, wfc3=q(wfc3), bfc3=bfc3)
    return params, ref


# -------------------- forward wrappers --------------------

@jax.jit
def simple_cnn_forward(x, params):
    x_row = x.reshape(1, H_IN * W_IN)                             # free metadata reshape (C_IN = 1)
    out_padded = pl.pallas_call(
        cnn_kernel,
        out_shape=jax.ShapeDtypeStruct((1, OUT_PAD), jnp.float32),
        in_specs=[_vmem_spec()] * 13,
        out_specs=_vmem_spec(),
    )(x_row, params["sT"], params["w1c"], params["b1"], params["w2t"], params["b2"],
      params["gT"], params["wfc1"], params["bfc1"], params["wfc2"], params["bfc2"],
      params["wfc3"], params["bfc3"])
    return out_padded[:, :FC3_OUT]                                # (1, 1)


def reference_forward(x, rp):
    # plain-JAX reference of the torch module (eval mode), mirroring the kernel's bf16
    # weight/activation quantization so the comparison is tight.
    dn = ("NCHW", "OIHW", "NCHW")
    bf = lambda a: a.astype(jnp.bfloat16).astype(jnp.float32)
    h1 = jax.lax.conv_general_dilated(x, rp["w1"], (1, 1), "VALID", dimension_numbers=dn)
    h1 = jnp.maximum(h1 + rp["b1"].reshape(1, C1, 1, 1), 0.0)
    h2 = jax.lax.conv_general_dilated(bf(h1), rp["w2"], (1, 1), "VALID", dimension_numbers=dn)
    h2 = jnp.maximum(h2 + rp["b2"].reshape(1, C2, 1, 1), 0.0)
    flat = h2.reshape(1, FC1_IN)                                  # torch: x.view(1, 16*32)
    h3 = jnp.maximum(bf(flat) @ rp["wfc1"].T + rp["bfc1"], 0.0)
    h4 = jnp.maximum(bf(h3) @ rp["wfc2"].T + rp["bfc2"], 0.0)
    return bf(h4) @ rp["wfc3"].T + rp["bfc3"]


if __name__ == "__main__":
    key = jax.random.PRNGKey(0)
    pkey, xkey = jax.random.split(key)
    params, ref_params = init_params(pkey)
    x = jax.random.normal(xkey, (1, C_IN, H_IN, W_IN), jnp.float32)   # NCHW, like PyTorch

    out = simple_cnn_forward(x, params)
    jax.block_until_ready(out)
    assert out.shape == (1, FC3_OUT) and out.dtype == jnp.float32

    ref = reference_forward(x, ref_params)
    np.testing.assert_allclose(np.asarray(out), np.asarray(ref), rtol=3e-2, atol=3e-2)

    print("KERNEL_OK")
</pallas_src>

<mosaic_0001>
module attributes {stable_mosaic.version = 11 : i64} {
  func.func @cnn_kernel(%arg0: memref<1x36xf32, #tpu.memory_space<vmem>>, %arg1: memref<4x36x25xf32, #tpu.memory_space<vmem>>, %arg2: memref<4x64x1xf32, #tpu.memory_space<vmem>>, %arg3: memref<64x1xf32, #tpu.memory_space<vmem>>, %arg4: memref<128x64xbf16, #tpu.memory_space<vmem>>, %arg5: memref<32x1xf32, #tpu.memory_space<vmem>>, %arg6: memref<4x25x16xf32, #tpu.memory_space<vmem>>, %arg7: memref<512x128xbf16, #tpu.memory_space<vmem>>, %arg8: memref<1x128xf32, #tpu.memory_space<vmem>>, %arg9: memref<128x64xbf16, #tpu.memory_space<vmem>>, %arg10: memref<1x64xf32, #tpu.memory_space<vmem>>, %arg11: memref<64x128xbf16, #tpu.memory_space<vmem>>, %arg12: memref<1x128xf32, #tpu.memory_space<vmem>>, %arg13: memref<1x128xf32, #tpu.memory_space<vmem>>) attributes {dimension_semantics = [], scalar_prefetch = 0 : i64, scratch_operands = 0 : i64, tpu.core_type = #tpu.core_type<tc>} {
    %c0 = arith.constant 0 : index
    %c0_0 = arith.constant 0 : index
    %0 = vector.load %arg0[%c0, %c0_0] : memref<1x36xf32, #tpu.memory_space<vmem>>, vector<1x36xf32>
    %cst = arith.constant 0.000000e+00 : f32
    %1 = vector.broadcast %cst : f32 to vector<64x25xf32>
    %c0_1 = arith.constant 0 : index
    %c0_2 = arith.constant 0 : index
    %c0_3 = arith.constant 0 : index
    %2 = vector.load %arg1[%c0_1, %c0_2, %c0_3] : memref<4x36x25xf32, #tpu.memory_space<vmem>>, vector<1x36x25xf32>
    %3 = vector.shape_cast %2 : vector<1x36x25xf32> to vector<36x25xf32>
    %cst_4 = arith.constant dense<0.000000e+00> : vector<1x25xf32>
    %4 = tpu.matmul %0, %3, %cst_4 {dimension_numbers = #tpu.dot_dimension_numbers<[1], [0], [0], [1], [0, 0, 1, 1], [], []>} : vector<1x36xf32>, vector<36x25xf32>, vector<1x25xf32> -> vector<1x25xf32>
    %c0_5 = arith.constant 0 : index
    %c0_6 = arith.constant 0 : index
    %c0_7 = arith.constant 0 : index
    %5 = vector.load %arg2[%c0_5, %c0_6, %c0_7] : memref<4x64x1xf32, #tpu.memory_space<vmem>>, vector<1x64x1xf32>
    %6 = vector.shape_cast %5 : vector<1x64x1xf32> to vector<64x1xf32>
    %7 = vector.broadcast %6 : vector<64x1xf32> to vector<64x25xf32>
    %8 = vector.broadcast %4 : vector<1x25xf32> to vector<64x25xf32>
    %9 = arith.mulf %7, %8 : vector<64x25xf32>
    %10 = arith.addf %1, %9 : vector<64x25xf32>
    %c1 = arith.constant 1 : index
    %c0_8 = arith.constant 0 : index
    %c0_9 = arith.constant 0 : index
    %11 = vector.load %arg1[%c1, %c0_8, %c0_9] : memref<4x36x25xf32, #tpu.memory_space<vmem>>, vector<1x36x25xf32>
    %12 = vector.shape_cast %11 : vector<1x36x25xf32> to vector<36x25xf32>
    %cst_10 = arith.constant dense<0.000000e+00> : vector<1x25xf32>
    %13 = tpu.matmul %0, %12, %cst_10 {dimension_numbers = #tpu.dot_dimension_numbers<[1], [0], [0], [1], [0, 0, 1, 1], [], []>} : vector<1x36xf32>, vector<36x25xf32>, vector<1x25xf32> -> vector<1x25xf32>
    %c1_11 = arith.constant 1 : index
    %c0_12 = arith.constant 0 : index
    %c0_13 = arith.constant 0 : index
    %14 = vector.load %arg2[%c1_11, %c0_12, %c0_13] : memref<4x64x1xf32, #tpu.memory_space<vmem>>, vector<1x64x1xf32>
    %15 = vector.shape_cast %14 : vector<1x64x1xf32> to vector<64x1xf32>
    %16 = vector.broadcast %15 : vector<64x1xf32> to vector<64x25xf32>
    %17 = vector.broadcast %13 : vector<1x25xf32> to vector<64x25xf32>
    %18 = arith.mulf %16, %17 : vector<64x25xf32>
    %19 = arith.addf %10, %18 : vector<64x25xf32>
    %c2 = arith.constant 2 : index
    %c0_14 = arith.constant 0 : index
    %c0_15 = arith.constant 0 : index
    %20 = vector.load %arg1[%c2, %c0_14, %c0_15] : memref<4x36x25xf32, #tpu.memory_space<vmem>>, vector<1x36x25xf32>
    %21 = vector.shape_cast %20 : vector<1x36x25xf32> to vector<36x25xf32>
    %cst_16 = arith.constant dense<0.000000e+00> : vector<1x25xf32>
    %22 = tpu.matmul %0, %21, %cst_16 {dimension_numbers = #tpu.dot_dimension_numbers<[1], [0], [0], [1], [0, 0, 1, 1], [], []>} : vector<1x36xf32>, vector<36x25xf32>, vector<1x25xf32> -> vector<1x25xf32>
    %c2_17 = arith.constant 2 : index
    %c0_18 = arith.constant 0 : index
    %c0_19 = arith.constant 0 : index
    %23 = vector.load %arg2[%c2_17, %c0_18, %c0_19] : memref<4x64x1xf32, #tpu.memory_space<vmem>>, vector<1x64x1xf32>
    %24 = vector.shape_cast %23 : vector<1x64x1xf32> to vector<64x1xf32>
    %25 = vector.broadcast %24 : vector<64x1xf32> to vector<64x25xf32>
    %26 = vector.broadcast %22 : vector<1x25xf32> to vector<64x25xf32>
    %27 = arith.mulf %25, %26 : vector<64x25xf32>
    %28 = arith.addf %19, %27 : vector<64x25xf32>
    %c3 = arith.constant 3 : index
    %c0_20 = arith.constant 0 : index
    %c0_21 = arith.constant 0 : index
    %29 = vector.load %arg1[%c3, %c0_20, %c0_21] : memref<4x36x25xf32, #tpu.memory_space<vmem>>, vector<1x36x25xf32>
    %30 = vector.shape_cast %29 : vector<1x36x25xf32> to vector<36x25xf32>
    %cst_22 = arith.constant dense<0.000000e+00> : vector<1x25xf32>
    %31 = tpu.matmul %0, %30, %cst_22 {dimension_numbers = #tpu.dot_dimension_numbers<[1], [0], [0], [1], [0, 0, 1, 1], [], []>} : vector<1x36xf32>, vector<36x25xf32>, vector<1x25xf32> -> vector<1x25xf32>
    %c3_23 = arith.constant 3 : index
    %c0_24 = arith.constant 0 : index
    %c0_25 = arith.constant 0 : index
    %32 = vector.load %arg2[%c3_23, %c0_24, %c0_25] : memref<4x64x1xf32, #tpu.memory_space<vmem>>, vector<1x64x1xf32>
    %33 = vector.shape_cast %32 : vector<1x64x1xf32> to vector<64x1xf32>
    %34 = vector.broadcast %33 : vector<64x1xf32> to vector<64x25xf32>
    %35 = vector.broadcast %31 : vector<1x25xf32> to vector<64x25xf32>
    %36 = arith.mulf %34, %35 : vector<64x25xf32>
    %37 = arith.addf %28, %36 : vector<64x25xf32>
    %c0_26 = arith.constant 0 : index
    %c0_27 = arith.constant 0 : index
    %38 = vector.load %arg3[%c0_26, %c0_27] : memref<64x1xf32, #tpu.memory_space<vmem>>, vector<64x1xf32>
    %39 = vector.broadcast %38 : vector<64x1xf32> to vector<64x25xf32>
    %40 = arith.addf %37, %39 : vector<64x25xf32>
    %cst_28 = arith.constant 0.000000e+00 : f32
    %41 = vector.broadcast %cst_28 : f32 to vector<64x25xf32>
    %42 = arith.maximumf %40, %41 : vector<64x25xf32>
    %c0_29 = arith.constant 0 : index
    %c0_30 = arith.constant 0 : index
    %43 = vector.load %arg4[%c0_29, %c0_30] : memref<128x64xbf16, #tpu.memory_space<vmem>>, vector<128x64xbf16>
    %44 = arith.truncf %42 : vector<64x25xf32> to vector<64x25xbf16>
    %cst_31 = arith.constant dense<0.000000e+00> : vector<128x25xf32>
    %45 = tpu.matmul %43, %44, %cst_31 {dimension_numbers = #tpu.dot_dimension_numbers<[1], [0], [0], [1], [0, 0, 1, 1], [], []>} : vector<128x64xbf16>, vector<64x25xbf16>, vector<128x25xf32> -> vector<128x25xf32>
    %cst_32 = arith.constant 0.000000e+00 : f32
    %46 = vector.broadcast %cst_32 : f32 to vector<32x16xf32>
    %47 = vector.extract_strided_slice %45 {offsets = [0, 0], sizes = [32, 25], strides = [1, 1]} : vector<128x25xf32> to vector<32x25xf32>
    %c0_33 = arith.constant 0 : index
    %c0_34 = arith.constant 0 : index
    %c0_35 = arith.constant 0 : index
    %48 = vector.load %arg6[%c0_33, %c0_34, %c0_35] : memref<4x25x16xf32, #tpu.memory_space<vmem>>, vector<1x25x16xf32>
    %49 = vector.shape_cast %48 : vector<1x25x16xf32> to vector<25x16xf32>
    %cst_36 = arith.constant dense<0.000000e+00> : vector<32x16xf32>
    %50 = tpu.matmul %47, %49, %cst_36 {dimension_numbers = #tpu.dot_dimension_numbers<[1], [0], [0], [1], [0, 0, 1, 1], [], []>} : vector<32x25xf32>, vector<25x16xf32>, vector<32x16xf32> -> vector<32x16xf32>
    %51 = arith.addf %46, %50 : vector<32x16xf32>
    %52 = vector.extract_strided_slice %45 {offsets = [32, 0], sizes = [32, 25], strides = [1, 1]} : vector<128x25xf32> to vector<32x25xf32>
    %c1_37 = arith.constant 1 : index
    %c0_38 = arith.constant 0 : index
    %c0_39 = arith.constant 0 : index
    %53 = vector.load %arg6[%c1_37, %c0_38, %c0_39] : memref<4x25x16xf32, #tpu.memory_space<vmem>>, vector<1x25x16xf32>
    %54 = vector.shape_cast %53 : vector<1x25x16xf32> to vector<25x16xf32>
    %cst_40 = arith.constant dense<0.000000e+00> : vector<32x16xf32>
    %55 = tpu.matmul %52, %54, %cst_40 {dimension_numbers = #tpu.dot_dimension_numbers<[1], [0], [0], [1], [0, 0, 1, 1], [], []>} : vector<32x25xf32>, vector<25x16xf32>, vector<32x16xf32> -> vector<32x16xf32>
    %56 = arith.addf %51, %55 : vector<32x16xf32>
    %57 = vector.extract_strided_slice %45 {offsets = [64, 0], sizes = [32, 25], strides = [1, 1]} : vector<128x25xf32> to vector<32x25xf32>
    %c2_41 = arith.constant 2 : index
    %c0_42 = arith.constant 0 : index
    %c0_43 = arith.constant 0 : index
    %58 = vector.load %arg6[%c2_41, %c0_42, %c0_43] : memref<4x25x16xf32, #tpu.memory_space<vmem>>, vector<1x25x16xf32>
    %59 = vector.shape_cast %58 : vector<1x25x16xf32> to vector<25x16xf32>
    %cst_44 = arith.constant dense<0.000000e+00> : vector<32x16xf32>
    %60 = tpu.matmul %57, %59, %cst_44 {dimension_numbers = #tpu.dot_dimension_numbers<[1], [0], [0], [1], [0, 0, 1, 1], [], []>} : vector<32x25xf32>, vector<25x16xf32>, vector<32x16xf32> -> vector<32x16xf32>
    %61 = arith.addf %56, %60 : vector<32x16xf32>
    %62 = vector.extract_strided_slice %45 {offsets = [96, 0], sizes = [32, 25], strides = [1, 1]} : vector<128x25xf32> to vector<32x25xf32>
    %c3_45 = arith.constant 3 : index
    %c0_46 = arith.constant 0 : index
    %c0_47 = arith.constant 0 : index
    %63 = vector.load %arg6[%c3_45, %c0_46, %c0_47] : memref<4x25x16xf32, #tpu.memory_space<vmem>>, vector<1x25x16xf32>
    %64 = vector.shape_cast %63 : vector<1x25x16xf32> to vector<25x16xf32>
    %cst_48 = arith.constant dense<0.000000e+00> : vector<32x16xf32>
    %65 = tpu.matmul %62, %64, %cst_48 {dimension_numbers = #tpu.dot_dimension_numbers<[1], [0], [0], [1], [0, 0, 1, 1], [], []>} : vector<32x25xf32>, vector<25x16xf32>, vector<32x16xf32> -> vector<32x16xf32>
    %66 = arith.addf %61, %65 : vector<32x16xf32>
    %c0_49 = arith.constant 0 : index
    %c0_50 = arith.constant 0 : index
    %67 = vector.load %arg5[%c0_49, %c0_50] : memref<32x1xf32, #tpu.memory_space<vmem>>, vector<32x1xf32>
    %68 = vector.broadcast %67 : vector<32x1xf32> to vector<32x16xf32>
    %69 = arith.addf %66, %68 : vector<32x16xf32>
    %cst_51 = arith.constant 0.000000e+00 : f32
    %70 = vector.broadcast %cst_51 : f32 to vector<32x16xf32>
    %71 = arith.maximumf %69, %70 : vector<32x16xf32>
    %72 = tpu.iota {dimensions = array<i32: 1>} : vector<16x512xi32>
    %73 = tpu.iota {dimensions = array<i32: 0>} : vector<16x512xi32>
    %c15_i32 = arith.constant 15 : i32
    %74 = vector.broadcast %c15_i32 : i32 to vector<16x512xi32>
    %75 = arith.andi %72, %74 : vector<16x512xi32>
    %76 = arith.cmpi eq, %75, %73 : vector<16x512xi32>
    %cst_52 = arith.constant 1.000000e+00 : f32
    %cst_53 = arith.constant 0.000000e+00 : f32
    %77 = vector.broadcast %cst_52 : f32 to vector<16x512xf32>
    %78 = vector.broadcast %cst_53 : f32 to vector<16x512xf32>
    %79 = arith.select %76, %77, %78 : vector<16x512xi1>, vector<16x512xf32>
    %cst_54 = arith.constant dense<0.000000e+00> : vector<32x512xf32>
    %80 = tpu.matmul %71, %79, %cst_54 {dimension_numbers = #tpu.dot_dimension_numbers<[1], [0], [0], [1], [0, 0, 1, 1], [], []>} : vector<32x16xf32>, vector<16x512xf32>, vector<32x512xf32> -> vector<32x512xf32>
    %81 = tpu.iota {dimensions = array<i32: 1>} : vector<32x512xi32>
    %82 = tpu.iota {dimensions = array<i32: 0>} : vector<32x512xi32>
    %c16_i32 = arith.constant 16 : i32
    %83 = vector.broadcast %c16_i32 : i32 to vector<32x512xi32>
    %84 = arith.muli %82, %83 : vector<32x512xi32>
    %85 = arith.cmpi sge, %81, %84 : vector<32x512xi32>
    %c16_i32_55 = arith.constant 16 : i32
    %86 = vector.broadcast %c16_i32_55 : i32 to vector<32x512xi32>
    %87 = arith.addi %84, %86 : vector<32x512xi32>
    %88 = arith.cmpi slt, %81, %87 : vector<32x512xi32>
    %89 = arith.andi %85, %88 : vector<32x512xi1>
    %cst_56 = arith.constant 0.000000e+00 : f32
    %90 = vector.broadcast %cst_56 : f32 to vector<32x512xf32>
    %91 = arith.select %89, %80, %90 : vector<32x512xi1>, vector<32x512xf32>
    %cst_57 = arith.constant dense<0.000000e+00> : vector<512xf32>
    %92 = vector.multi_reduction <add>, %91, %cst_57 [0] : vector<32x512xf32> to vector<512xf32>
    %93 = vector.shape_cast %92 : vector<512xf32> to vector<1x512xf32>
    %94 = arith.truncf %93 : vector<1x512xf32> to vector<1x512xbf16>
    %c0_58 = arith.constant 0 : index
    %c0_59 = arith.constant 0 : index
    %95 = vector.load %arg7[%c0_58, %c0_59] : memref<512x128xbf16, #tpu.memory_space<vmem>>, vector<512x128xbf16>
    %cst_60 = arith.constant dense<0.000000e+00> : vector<1x128xf32>
    %96 = tpu.matmul %94, %95, %cst_60 {dimension_numbers = #tpu.dot_dimension_numbers<[1], [0], [0], [1], [0, 0, 1, 1], [], []>} : vector<1x512xbf16>, vector<512x128xbf16>, vector<1x128xf32> -> vector<1x128xf32>
    %c0_61 = arith.constant 0 : index
    %c0_62 = arith.constant 0 : index
    %97 = vector.load %arg8[%c0_61, %c0_62] : memref<1x128xf32, #tpu.memory_space<vmem>>, vector<1x128xf32>
    %98 = arith.addf %96, %97 : vector<1x128xf32>
    %cst_63 = arith.constant 0.000000e+00 : f32
    %99 = vector.broadcast %cst_63 : f32 to vector<1x128xf32>
    %100 = arith.maximumf %98, %99 : vector<1x128xf32>
    %101 = arith.truncf %100 : vector<1x128xf32> to vector<1x128xbf16>
    %c0_64 = arith.constant 0 : index
    %c0_65 = arith.constant 0 : index
    %102 = vector.load %arg9[%c0_64, %c0_65] : memref<128x64xbf16, #tpu.memory_space<vmem>>, vector<128x64xbf16>
    %cst_66 = arith.constant dense<0.000000e+00> : vector<1x64xf32>
    %103 = tpu.matmul %101, %102, %cst_66 {dimension_numbers = #tpu.dot_dimension_numbers<[1], [0], [0], [1], [0, 0, 1, 1], [], []>} : vector<1x128xbf16>, vector<128x64xbf16>, vector<1x64xf32> -> vector<1x64xf32>
    %c0_67 = arith.constant 0 : index
    %c0_68 = arith.constant 0 : index
    %104 = vector.load %arg10[%c0_67, %c0_68] : memref<1x64xf32, #tpu.memory_space<vmem>>, vector<1x64xf32>
    %105 = arith.addf %103, %104 : vector<1x64xf32>
    %cst_69 = arith.constant 0.000000e+00 : f32
    %106 = vector.broadcast %cst_69 : f32 to vector<1x64xf32>
    %107 = arith.maximumf %105, %106 : vector<1x64xf32>
    %108 = arith.truncf %107 : vector<1x64xf32> to vector<1x64xbf16>
    %c0_70 = arith.constant 0 : index
    %c0_71 = arith.constant 0 : index
    %109 = vector.load %arg11[%c0_70, %c0_71] : memref<64x128xbf16, #tpu.memory_space<vmem>>, vector<64x128xbf16>
    %cst_72 = arith.constant dense<0.000000e+00> : vector<1x128xf32>
    %110 = tpu.matmul %108, %109, %cst_72 {dimension_numbers = #tpu.dot_dimension_numbers<[1], [0], [0], [1], [0, 0, 1, 1], [], []>} : vector<1x64xbf16>, vector<64x128xbf16>, vector<1x128xf32> -> vector<1x128xf32>
    %c0_73 = arith.constant 0 : index
    %c0_74 = arith.constant 0 : index
    %111 = vector.load %arg12[%c0_73, %c0_74] : memref<1x128xf32, #tpu.memory_space<vmem>>, vector<1x128xf32>
    %112 = arith.addf %110, %111 : vector<1x128xf32>
    %c0_75 = arith.constant 0 : index
    %c0_76 = arith.constant 0 : index
    %113 = vector.load %arg13[%c0_75, %c0_76] : memref<1x128xf32, #tpu.memory_space<vmem>>, vector<1x128xf32>
    tpu.vector_store %arg13[%c0_75, %c0_76], %112 {strides = array<i32>} : memref<1x128xf32, #tpu.memory_space<vmem>>, vector<1x128xf32>,
    return
  }
}

</mosaic_0001>

<llo_original>
// kernel: simple_cnn_forward.1
$region0: #{simple_cnn_forward.1}
  #allocation0 [shape = 'u32[]', space=smem, size = 0x4, offset = 0x4, fixed_abs, tag = 'smem constant byte address 0x4 - core index']
  #allocation1 [shape = 'u32[144,128]{1,0:T(1,128)}', space=vmem, size = 0x12000, scoped, tag = 'internal scratch']
  %s0 = inlined_call_operand.vmem [shape: f32[1,36], index: 0, kind: input, shape index: {}]
  %s1 = inlined_call_operand.vmem [shape: f32[4,36,25], index: 1, kind: input, shape index: {}]
  %s2 = inlined_call_operand.vmem [shape: f32[4,64,1], index: 2, kind: input, shape index: {}]
  %s3 = inlined_call_operand.vmem [shape: f32[64,1], index: 3, kind: input, shape index: {}]
  %s4 = inlined_call_operand.vmem [shape: bf16[128,64], index: 4, kind: input, shape index: {}]
  %s5 = inlined_call_operand.vmem [shape: f32[32,1], index: 5, kind: input, shape index: {}]
  %s6 = inlined_call_operand.vmem [shape: f32[4,25,16], index: 6, kind: input, shape index: {}]
  %s7 = inlined_call_operand.vmem [shape: bf16[512,128], index: 7, kind: input, shape index: {}]
  %s8 = inlined_call_operand.vmem [shape: f32[1,128], index: 8, kind: input, shape index: {}]
  %s9 = inlined_call_operand.vmem [shape: bf16[128,64], index: 9, kind: input, shape index: {}]
  %s10 = inlined_call_operand.vmem [shape: f32[1,64], index: 10, kind: input, shape index: {}]
  %s11 = inlined_call_operand.vmem [shape: bf16[64,128], index: 11, kind: input, shape index: {}]
  %s12 = inlined_call_operand.vmem [shape: f32[1,128], index: 12, kind: input, shape index: {}]
  %s13 = inlined_call_operand.hbm [shape: f32[1,128], index: 13, kind: output, shape index: {}]
  %s14 = sld [smem:[#allocation0]]
  $region62: #{simple_cnn_forward.1} parent=0
    _
  %s16 = ssub.s32 1, %s14
  %s17 = scalar_select 0, %s16, %s14
  $region1: #{simple_cnn_forward.1} parent=0
    #allocation2 [shape = 'u8[512]{0}', space=vmem, size = 0x400, scoped, tag = 'output window, operand 0, single buffered']
    #allocation3 [shape = 's32[1]{0}', space=sflag, size = 0x4, scoped, tag = 'scoped memory for simple_cnn_forward.1']
    %18 = vsyncpa [#allocation3], 0
    // Predicated region
    $region2: #{simple_cnn_forward.1} parent=1 // pred_check
      _
    $region3: #{simple_cnn_forward.1} parent=1 // pred_check_branch
      %20 = sbr.rel (0) target = $region5
    $region4: #{simple_cnn_forward.1} parent=1 // pred_region
      _
    $region5: #{simple_cnn_forward.1} parent=1 // pred_fallthru
      _
    // Predicated region
    $region6: #{simple_cnn_forward.1} parent=1 // pred_check
      _
    $region7: #{simple_cnn_forward.1} parent=1 // pred_check_branch
      %22 = sbr.rel (0) target = $region9
    $region8: #{simple_cnn_forward.1} parent=1 // pred_region
      _
    $region9: #{simple_cnn_forward.1} parent=1 // pred_fallthru
      _
    // Predicated region
    $region10: #{simple_cnn_forward.1} parent=1 // pred_check
      _
    $region11: #{simple_cnn_forward.1} parent=1 // pred_check_branch
      %24 = sbr.rel (0) target = $region13
    $region12: #{simple_cnn_forward.1} parent=1 // pred_region
      _
    $region13: #{simple_cnn_forward.1} parent=1 // pred_fallthru
      _
    // Predicated region
    $region14: #{simple_cnn_forward.1} parent=1 // pred_check
      _
    $region15: #{simple_cnn_forward.1} parent=1 // pred_check_branch
      %26 = sbr.rel (0) target = $region17
    $region16: #{simple_cnn_forward.1} parent=1 // pred_region
      _
    $region17: #{simple_cnn_forward.1} parent=1 // pred_fallthru
      _
    // Predicated region
    $region18: #{simple_cnn_forward.1} parent=1 // pred_check
      _
    $region19: #{simple_cnn_forward.1} parent=1 // pred_check_branch
      %28 = sbr.rel (0) target = $region21
    $region20: #{simple_cnn_forward.1} parent=1 // pred_region
      _
    $region21: #{simple_cnn_forward.1} parent=1 // pred_fallthru
      _
    // Predicated region
    $region22: #{simple_cnn_forward.1} parent=1 // pred_check
      _
    $region23: #{simple_cnn_forward.1} parent=1 // pred_check_branch
      %30 = sbr.rel (0) target = $region25
    $region24: #{simple_cnn_forward.1} parent=1 // pred_region
      _
    $region25: #{simple_cnn_forward.1} parent=1 // pred_fallthru
      _
    // Predicated region
    $region26: #{simple_cnn_forward.1} parent=1 // pred_check
      _
    $region27: #{simple_cnn_forward.1} parent=1 // pred_check_branch
      %32 = sbr.rel (0) target = $region29
    $region28: #{simple_cnn_forward.1} parent=1 // pred_region
      _
    $region29: #{simple_cnn_forward.1} parent=1 // pred_fallthru
      _
    // Predicated region
    $region30: #{simple_cnn_forward.1} parent=1 // pred_check
      _
    $region31: #{simple_cnn_forward.1} parent=1 // pred_check_branch
      %34 = sbr.rel (0) target = $region33
    $region32: #{simple_cnn_forward.1} parent=1 // pred_region
      _
    $region33: #{simple_cnn_forward.1} parent=1 // pred_fallthru
      _
    // Predicated region
    $region34: #{simple_cnn_forward.1} parent=1 // pred_check
      _
    $region35: #{simple_cnn_forward.1} parent=1 // pred_check_branch
      %36 = sbr.rel (0) target = $region37
    $region36: #{simple_cnn_forward.1} parent=1 // pred_region
      _
    $region37: #{simple_cnn_forward.1} parent=1 // pred_fallthru
      _
    // Predicated region
    $region38: #{simple_cnn_forward.1} parent=1 // pred_check
      _
    $region39: #{simple_cnn_forward.1} parent=1 // pred_check_branch
      %38 = sbr.rel (0) target = $region41
    $region40: #{simple_cnn_forward.1} parent=1 // pred_region
      _
    $region41: #{simple_cnn_forward.1} parent=1 // pred_fallthru
      _
    // Predicated region
    $region42: #{simple_cnn_forward.1} parent=1 // pred_check
      _
    $region43: #{simple_cnn_forward.1} parent=1 // pred_check_branch
      %40 = sbr.rel (0) target = $region45
    $region44: #{simple_cnn_forward.1} parent=1 // pred_region
      _
    $region45: #{simple_cnn_forward.1} parent=1 // pred_fallthru
      _
    // Predicated region
    $region46: #{simple_cnn_forward.1} parent=1 // pred_check
      _
    $region47: #{simple_cnn_forward.1} parent=1 // pred_check_branch
      %42 = sbr.rel (0) target = $region49
    $region48: #{simple_cnn_forward.1} parent=1 // pred_region
      _
    $region49: #{simple_cnn_forward.1} parent=1 // pred_fallthru
      _
    // Predicated region
    $region50: #{simple_cnn_forward.1} parent=1 // pred_check
      _
    $region51: #{simple_cnn_forward.1} parent=1 // pred_check_branch
      %44 = sbr.rel (0) target = $region53
    $region52: #{simple_cnn_forward.1} parent=1 // pred_region
      _
    $region53: #{simple_cnn_forward.1} parent=1 // pred_fallthru
      _
    %v46 = vld [vmem:[%s0] sm:$0x1]
    %v47 = vld [vmem:[%s1] sm:$0xff]
    %v48 = vld [vmem:[%s1 + $0x8] sm:$0xff]
    %v49 = vld [vmem:[%s1 + $0x10] sm:$0xff]
    %v50 = vld [vmem:[%s1 + $0x18] sm:$0xff]
    %v51 = vld [vmem:[%s1 + $0x20] sm:$0xf]
    %vm52 = vcmask 293888
    %v54 = vsel %vm52, %v46, 0
    %vm56 = vcmask 1043456
    %v58 = vsel %vm56, %v51, 0
    %60 = vmatprep.subr.mxu0 0.0
    %61 = vmatpush1.msra.mxu0 %v47
    %62 = vmatprep.subr.mxu0 0.0
    %63 = vmatpush1.msra.mxu0 %v48
    %64 = vmatprep.subr.mxu0 0.0
    %65 = vmatpush1.msra.mxu0 %v49
    %66 = vmatprep.subr.mxu0 0.0
    %67 = vmatpush1.msra.mxu0 %v50
    %68 = vmatprep.subr.mxu0 0.0
    %69 = vmatpush1.msra.mxu0 %v58
    %70 = vmatprep.subr.mxu0 0.0
    %71 = vmatpush1.msra.mxu0 0.0
    %72 = vmatprep.subr.mxu0 0.0
    %73 = vmatpush1.msra.mxu0 0.0
    %74 = vmatprep.subr.mxu0 0.0
    %75 = vmatpush1.msra.mxu0 0.0
    %76 = vmatprep.subr.mxu0 0.0
    %77 = vmatpush1.msra.mxu0 0.0
    %78 = vmatprep.subr.mxu0 0.0
    %79 = vmatpush1.msra.mxu0 0.0
    %80 = vmatprep.subr.mxu0 0.0
    %81 = vmatpush1.msra.mxu0 0.0
    %82 = vmatprep.subr.mxu0 0.0
    %83 = vmatpush1.msra.mxu0 0.0
    %84 = vmatprep.subr.mxu0 0.0
    %85 = vmatpush1.msra.mxu0 0.0
    %86 = vmatprep.subr.mxu0 0.0
    %87 = vmatpush1.msra.mxu0 0.0
    %88 = vmatprep.subr.mxu0 0.0
    %89 = vmatpush1.msra.mxu0 0.0
    %90 = vmatprep.subr.mxu0 0.0
    %91 = vmatpush1.msra.mxu0 0.0
    %92 = vmatprep.subr.mxu0 0.0
    %93 = vmatpush1.msra.mxu0 0.0
    %94 = vmatprep.subr.mxu0 0.0
    %95 = vmatpush1.msra.mxu0 0.0
    %96 = vmatprep.subr.mxu0 0.0
    %97 = vmatpush1.msra.mxu0 0.0
    %98 = vmatprep.subr.mxu0 0.0
    %99 = vmatpush1.msra.mxu0 0.0
    %100 = vmatprep.subr.mxu0 0.0
    %101 = vmatpush1.msra.mxu0 0.0
    %102 = vmatprep.subr.mxu0 0.0
    %103 = vmatpush1.msra.mxu0 0.0
    %104 = vmatprep.subr.mxu0 0.0
    %105 = vmatpush1.msra.mxu0 0.0
    %106 = vmatprep.subr.mxu0 0.0
    %107 = vmatpush1.msra.mxu0 0.0
    %108 = vmatprep.subr.mxu0 0.0
    %109 = vmatpush1.msra.mxu0 0.0
    %110 = vmatprep.subr.mxu0 0.0
    %111 = vmatpush1.msra.mxu0 0.0
    %112 = vmatprep.subr.mxu0 0.0
    %113 = vmatpush1.msra.mxu0 0.0
    %114 = vmatprep.subr.mxu0 0.0
    %115 = vmatpush1.msra.mxu0 0.0
    %116 = vmatprep.subr.mxu0 0.0
    %117 = vmatpush1.msra.mxu0 0.0
    %118 = vmatprep.subr.mxu0 0.0
    %119 = vmatpush1.msra.mxu0 0.0
    %120 = vmatprep.subr.mxu0 0.0
    %121 = vmatpush1.msra.mxu0 0.0
    %122 = vmatprep.subr.mxu0 0.0
    %123 = vmatpush1.msra.mxu0 0.0
    %124 = vmatprep.mubr.f32.mxu0 0.0
    %125 = vmatmul.mubr.f32.gmra.mrb[0].mxu0 %v54
    %v126 = vpop.f32.mrb[0].mxu0
    %v127 = vadd.f32 0.0, %v126
    %v128 = vpop.f32.mrb[0].mxu0
    %129 = vdwg.mxu0
    %v130 = vld [vmem:[%s2] sm:$0xff]
    %v131 = vld [vmem:[%s2 + $0x8] sm:$0xff]
    %v132 = vld [vmem:[%s2 + $0x10] sm:$0xff]
    %v133 = vld [vmem:[%s2 + $0x18] sm:$0xff]
    %v134 = vld [vmem:[%s2 + $0x20] sm:$0xff]
    %v135 = vld [vmem:[%s2 + $0x28] sm:$0xff]
    %v136 = vld [vmem:[%s2 + $0x30] sm:$0xff]
    %v137 = vld [vmem:[%s2 + $0x38] sm:$0xff]
    %139 = vset.pattern.permute.xlu0 0
    %140 = vperm.xlu0 %139, %v130
    %v141 = vpop.permute.xlu0 %140
    %144 = vset.pattern.permute.xlu0 0
    %145 = vperm.xlu0 %144, %v131
    %v146 = vpop.permute.xlu0 %145
    %149 = vset.pattern.permute.xlu0 0
    %150 = vperm.xlu0 %149, %v132
    %v151 = vpop.permute.xlu0 %150
    %154 = vset.pattern.permute.xlu0 0
    %155 = vperm.xlu0 %154, %v133
    %v156 = vpop.permute.xlu0 %155
    %159 = vset.pattern.permute.xlu0 0
    %160 = vperm.xlu0 %159, %v134
    %v161 = vpop.permute.xlu0 %160
    %164 = vset.pattern.permute.xlu0 0
    %165 = vperm.xlu0 %164, %v135
    %v166 = vpop.permute.xlu0 %165
    %169 = vset.pattern.permute.xlu0 0
    %170 = vperm.xlu0 %169, %v136
    %v171 = vpop.permute.xlu0 %170
    %174 = vset.pattern.permute.xlu0 0
    %175 = vperm.xlu0 %174, %v137
    %v176 = vpop.permute.xlu0 %175
    %v178 = vlaneseq
    %v179 = vshrl.u32 %v178, 7
    %v180 = vsub.s32 0, %v179
    %v181 = vrot.slane %v127, %v180
    %v182 = vmul.f32 %v141, %v181
    %v183 = vmul.f32 %v146, %v181
    %v184 = vmul.f32 %v151, %v181
    %v185 = vmul.f32 %v156, %v181
    %v186 = vmul.f32 %v161, %v181
    %v187 = vmul.f32 %v166, %v181
    %v188 = vmul.f32 %v171, %v181
    %v189 = vmul.f32 %v176, %v181
    %v190 = vadd.f32 %v182, 0.0
    %v191 = vadd.f32 %v183, 0.0
    %v192 = vadd.f32 %v184, 0.0
    %v193 = vadd.f32 %v185, 0.0
    %v194 = vadd.f32 %v186, 0.0
    %v195 = vadd.f32 %v187, 0.0
    %v196 = vadd.f32 %v188, 0.0
    %v197 = vadd.f32 %v189, 0.0
    %s198 = scalar_lea.vmem %s1, 40
    %v199 = vld [vmem:[%s198] sm:$0xff]
    %v200 = vld [vmem:[%s198 + $0x8] sm:$0xff]
    %v201 = vld [vmem:[%s198 + $0x10] sm:$0xff]
    %v202 = vld [vmem:[%s198 + $0x18] sm:$0xff]
    %v203 = vld [vmem:[%s198 + $0x20] sm:$0xf]
    %v205 = vsel %vm56, %v203, 0
    %207 = vmatprep.subr.mxu0 0.0
    %208 = vmatpush1.msra.mxu0 %v199
    %209 = vmatprep.subr.mxu0 0.0
    %210 = vmatpush1.msra.mxu0 %v200
    %211 = vmatprep.subr.mxu0 0.0
    %212 = vmatpush1.msra.mxu0 %v201
    %213 = vmatprep.subr.mxu0 0.0
    %214 = vmatpush1.msra.mxu0 %v202
    %215 = vmatprep.subr.mxu0 0.0
    %216 = vmatpush1.msra.mxu0 %v205
    %217 = vmatprep.subr.mxu0 0.0
    %218 = vmatpush1.msra.mxu0 0.0
    %219 = vmatprep.subr.mxu0 0.0
    %220 = vmatpush1.msra.mxu0 0.0
    %221 = vmatprep.subr.mxu0 0.0
    %222 = vmatpush1.msra.mxu0 0.0
    %223 = vmatprep.subr.mxu0 0.0
    %224 = vmatpush1.msra.mxu0 0.0
    %225 = vmatprep.subr.mxu0 0.0
    %226 = vmatpush1.msra.mxu0 0.0
    %227 = vmatprep.subr.mxu0 0.0
    %228 = vmatpush1.msra.mxu0 0.0
    %229 = vmatprep.subr.mxu0 0.0
    %230 = vmatpush1.msra.mxu0 0.0
    %231 = vmatprep.subr.mxu0 0.0
    %232 = vmatpush1.msra.mxu0 0.0
    %233 = vmatprep.subr.mxu0 0.0
    %234 = vmatpush1.msra.mxu0 0.0
    %235 = vmatprep.subr.mxu0 0.0
    %236 = vmatpush1.msra.mxu0 0.0
    %237 = vmatprep.subr.mxu0 0.0
    %238 = vmatpush1.msra.mxu0 0.0
    %239 = vmatprep.subr.mxu0 0.0
    %240 = vmatpush1.msra.mxu0 0.0
    %241 = vmatprep.subr.mxu0 0.0
    %242 = vmatpush1.msra.mxu0 0.0
    %243 = vmatprep.subr.mxu0 0.0
    %244 = vmatpush1.msra.mxu0 0.0
    %245 = vmatprep.subr.mxu0 0.0
    %246 = vmatpush1.msra.mxu0 0.0
    %247 = vmatprep.subr.mxu0 0.0
    %248 = vmatpush1.msra.mxu0 0.0
    %249 = vmatprep.subr.mxu0 0.0
    %250 = vmatpush1.msra.mxu0 0.0
    %251 = vmatprep.subr.mxu0 0.0
    %252 = vmatpush1.msra.mxu0 0.0
    %253 = vmatprep.subr.mxu0 0.0
    %254 = vmatpush1.msra.mxu0 0.0
    %255 = vmatprep.subr.mxu0 0.0
    %256 = vmatpush1.msra.mxu0 0.0
    %257 = vmatprep.subr.mxu0 0.0
    %258 = vmatpush1.msra.mxu0 0.0
    %259 = vmatprep.subr.mxu0 0.0
    %260 = vmatpush1.msra.mxu0 0.0
    %261 = vmatprep.subr.mxu0 0.0
    %262 = vmatpush1.msra.mxu0 0.0
    %263 = vmatprep.subr.mxu0 0.0
    %264 = vmatpush1.msra.mxu0 0.0
    %265 = vmatprep.subr.mxu0 0.0
    %266 = vmatpush1.msra.mxu0 0.0
    %267 = vmatprep.subr.mxu0 0.0
    %268 = vmatpush1.msra.mxu0 0.0
    %269 = vmatprep.subr.mxu0 0.0
    %270 = vmatpush1.msra.mxu0 0.0
    %271 = vmatprep.mubr.f32.mxu0 0.0
    %272 = vmatmul.mubr.f32.gmra.mrb[0].mxu0 %v54
    %v273 = vpop.f32.mrb[0].mxu0
    %v274 = vadd.f32 0.0, %v273
    %v275 = vpop.f32.mrb[0].mxu0
    %276 = vdwg.mxu0
    %s277 = scalar_lea.vmem %s2, 64
    %v278 = vld [vmem:[%s277] sm:$0xff]
    %v279 = vld [vmem:[%s277 + $0x8] sm:$0xff]
    %v280 = vld [vmem:[%s277 + $0x10] sm:$0xff]
    %v281 = vld [vmem:[%s277 + $0x18] sm:$0xff]
    %v282 = vld [vmem:[%s277 + $0x20] sm:$0xff]
    %v283 = vld [vmem:[%s277 + $0x28] sm:$0xff]
    %v284 = vld [vmem:[%s277 + $0x30] sm:$0xff]
    %v285 = vld [vmem:[%s277 + $0x38] sm:$0xff]
    %287 = vset.pattern.permute.xlu0 0
    %288 = vperm.xlu0 %287, %v278
    %v289 = vpop.permute.xlu0 %288
    %292 = vset.pattern.permute.xlu0 0
    %293 = vperm.xlu0 %292, %v279
    %v294 = vpop.permute.xlu0 %293
    %297 = vset.pattern.permute.xlu0 0
    %298 = vperm.xlu0 %297, %v280
    %v299 = vpop.permute.xlu0 %298
    %302 = vset.pattern.permute.xlu0 0
    %303 = vperm.xlu0 %302, %v281
    %v304 = vpop.permute.xlu0 %303
    %307 = vset.pattern.permute.xlu0 0
    %308 = vperm.xlu0 %307, %v282
    %v309 = vpop.permute.xlu0 %308
    %312 = vset.pattern.permute.xlu0 0
    %313 = vperm.xlu0 %312, %v283
    %v314 = vpop.permute.xlu0 %313
    %317 = vset.pattern.permute.xlu0 0
    %318 = vperm.xlu0 %317, %v284
    %v319 = vpop.permute.xlu0 %318
    %322 = vset.pattern.permute.xlu0 0
    %323 = vperm.xlu0 %322, %v285
    %v324 = vpop.permute.xlu0 %323
    %v326 = vlaneseq
    %v327 = vshrl.u32 %v326, 7
    %v328 = vsub.s32 0, %v327
    %v329 = vrot.slane %v274, %v328
    %v330 = vmul.f32 %v289, %v329
    %v331 = vmul.f32 %v294, %v329
    %v332 = vmul.f32 %v299, %v329
    %v333 = vmul.f32 %v304, %v329
    %v334 = vmul.f32 %v309, %v329
    %v335 = vmul.f32 %v314, %v329
    %v336 = vmul.f32 %v319, %v329
    %v337 = vmul.f32 %v324, %v329
    %v338 = vadd.f32 %v190, %v330
    %v339 = vadd.f32 %v191, %v331
    %v340 = vadd.f32 %v192, %v332
    %v341 = vadd.f32 %v193, %v333
    %v342 = vadd.f32 %v194, %v334
    %v343 = vadd.f32 %v195, %v335
    %v344 = vadd.f32 %v196, %v336
    %v345 = vadd.f32 %v197, %v337
    %s346 = scalar_lea.vmem %s1, 80
    %v347 = vld [vmem:[%s346] sm:$0xff]
    %v348 = vld [vmem:[%s346 + $0x8] sm:$0xff]
    %v349 = vld [vmem:[%s346 + $0x10] sm:$0xff]
    %v350 = vld [vmem:[%s346 + $0x18] sm:$0xff]
    %v351 = vld [vmem:[%s346 + $0x20] sm:$0xf]
    %v353 = vsel %vm56, %v351, 0
    %355 = vmatprep.subr.mxu0 0.0
    %356 = vmatpush1.msra.mxu0 %v347
    %357 = vmatprep.subr.mxu0 0.0
    %358 = vmatpush1.msra.mxu0 %v348
    %359 = vmatprep.subr.mxu0 0.0
    %360 = vmatpush1.msra.mxu0 %v349
    %361 = vmatprep.subr.mxu0 0.0
    %362 = vmatpush1.msra.mxu0 %v350
    %363 = vmatprep.subr.mxu0 0.0
    %364 = vmatpush1.msra.mxu0 %v353
    %365 = vmatprep.subr.mxu0 0.0
    %366 = vmatpush1.msra.mxu0 0.0
    %367 = vmatprep.subr.mxu0 0.0
    %368 = vmatpush1.msra.mxu0 0.0
    %369 = vmatprep.subr.mxu0 0.0
    %370 = vmatpush1.msra.mxu0 0.0
    %371 = vmatprep.subr.mxu0 0.0
    %372 = vmatpush1.msra.mxu0 0.0
    %373 = vmatprep.subr.mxu0 0.0
    %374 = vmatpush1.msra.mxu0 0.0
    %375 = vmatprep.subr.mxu0 0.0
    %376 = vmatpush1.msra.mxu0 0.0
    %377 = vmatprep.subr.mxu0 0.0
    %378 = vmatpush1.msra.mxu0 0.0
    %379 = vmatprep.subr.mxu0 0.0
    %380 = vmatpush1.msra.mxu0 0.0
    %381 = vmatprep.subr.mxu0 0.0
    %382 = vmatpush1.msra.mxu0 0.0
    %383 = vmatprep.subr.mxu0 0.0
    %384 = vmatpush1.msra.mxu0 0.0
    %385 = vmatprep.subr.mxu0 0.0
    %386 = vmatpush1.msra.mxu0 0.0
    %387 = vmatprep.subr.mxu0 0.0
    %388 = vmatpush1.msra.mxu0 0.0
    %389 = vmatprep.subr.mxu0 0.0
    %390 = vmatpush1.msra.mxu0 0.0
    %391 = vmatprep.subr.mxu0 0.0
    %392 = vmatpush1.msra.mxu0 0.0
    %393 = vmatprep.subr.mxu0 0.0
    %394 = vmatpush1.msra.mxu0 0.0
    %395 = vmatprep.subr.mxu0 0.0
    %396 = vmatpush1.msra.mxu0 0.0
    %397 = vmatprep.subr.mxu0 0.0
    %398 = vmatpush1.msra.mxu0 0.0
    %399 = vmatprep.subr.mxu0 0.0
    %400 = vmatpush1.msra.mxu0 0.0
    %401 = vmatprep.subr.mxu0 0.0
    %402 = vmatpush1.msra.mxu0 0.0
    %403 = vmatprep.subr.mxu0 0.0
    %404 = vmatpush1.msra.mxu0 0.0
    %405 = vmatprep.subr.mxu0 0.0
    %406 = vmatpush1.msra.mxu0 0.0
    %407 = vmatprep.subr.mxu0 0.0
    %408 = vmatpush1.msra.mxu0 0.0
    %409 = vmatprep.subr.mxu0 0.0
    %410 = vmatpush1.msra.mxu0 0.0
    %411 = vmatprep.subr.mxu0 0.0
    %412 = vmatpush1.msra.mxu0 0.0
    %413 = vmatprep.subr.mxu0 0.0
    %414 = vmatpush1.msra.mxu0 0.0
    %415 = vmatprep.subr.mxu0 0.0
    %416 = vmatpush1.msra.mxu0 0.0
    %417 = vmatprep.subr.mxu0 0.0
    %418 = vmatpush1.msra.mxu0 0.0
    %419 = vmatprep.mubr.f32.mxu0 0.0
    %420 = vmatmul.mubr.f32.gmra.mrb[0].mxu0 %v54
    %v421 = vpop.f32.mrb[0].mxu0
    %v422 = vadd.f32 0.0, %v421
    %v423 = vpop.f32.mrb[0].mxu0
    %424 = vdwg.mxu0
    %s425 = scalar_lea.vmem %s2, 128
    %v426 = vld [vmem:[%s425] sm:$0xff]
    %v427 = vld [vmem:[%s425 + $0x8] sm:$0xff]
    %v428 = vld [vmem:[%s425 + $0x10] sm:$0xff]
    %v429 = vld [vmem:[%s425 + $0x18] sm:$0xff]
    %v430 = vld [vmem:[%s425 + $0x20] sm:$0xff]
    %v431 = vld [vmem:[%s425 + $0x28] sm:$0xff]
    %v432 = vld [vmem:[%s425 + $0x30] sm:$0xff]
    %v433 = vld [vmem:[%s425 + $0x38] sm:$0xff]
    %435 = vset.pattern.permute.xlu0 0
    %436 = vperm.xlu0 %435, %v426
    %v437 = vpop.permute.xlu0 %436
    %440 = vset.pattern.permute.xlu0 0
    %441 = vperm.xlu0 %440, %v427
    %v442 = vpop.permute.xlu0 %441
    %445 = vset.pattern.permute.xlu0 0
    %446 = vperm.xlu0 %445, %v428
    %v447 = vpop.permute.xlu0 %446
    %450 = vset.pattern.permute.xlu0 0
    %451 = vperm.xlu0 %450, %v429
    %v452 = vpop.permute.xlu0 %451
    %455 = vset.pattern.permute.xlu0 0
    %456 = vperm.xlu0 %455, %v430
    %v457 = vpop.permute.xlu0 %456
    %460 = vset.pattern.permute.xlu0 0
    %461 = vperm.xlu0 %460, %v431
    %v462 = vpop.permute.xlu0 %461
    %465 = vset.pattern.permute.xlu0 0
    %466 = vperm.xlu0 %465, %v432
    %v467 = vpop.permute.xlu0 %466
    %470 = vset.pattern.permute.xlu0 0
    %471 = vperm.xlu0 %470, %v433
    %v472 = vpop.permute.xlu0 %471
    %v474 = vlaneseq
    %v475 = vshrl.u32 %v474, 7
    %v476 = vsub.s32 0, %v475
    %v477 = vrot.slane %v422, %v476
    %v478 = vmul.f32 %v437, %v477
    %v479 = vmul.f32 %v442, %v477
    %v480 = vmul.f32 %v447, %v477
    %v481 = vmul.f32 %v452, %v477
    %v482 = vmul.f32 %v457, %v477
    %v483 = vmul.f32 %v462, %v477
    %v484 = vmul.f32 %v467, %v477
    %v485 = vmul.f32 %v472, %v477
    %v486 = vadd.f32 %v338, %v478
    %v487 = vadd.f32 %v339, %v479
    %v488 = vadd.f32 %v340, %v480
    %v489 = vadd.f32 %v341, %v481
    %v490 = vadd.f32 %v342, %v482
    %v491 = vadd.f32 %v343, %v483
    %v492 = vadd.f32 %v344, %v484
    %v493 = vadd.f32 %v345, %v485
    %s494 = scalar_lea.vmem %s1, 120
    %v495 = vld [vmem:[%s494] sm:$0xff]
    %v496 = vld [vmem:[%s494 + $0x8] sm:$0xff]
    %v497 = vld [vmem:[%s494 + $0x10] sm:$0xff]
    %v498 = vld [vmem:[%s494 + $0x18] sm:$0xff]
    %v499 = vld [vmem:[%s494 + $0x20] sm:$0xf]
    %v501 = vsel %vm56, %v499, 0
    %503 = vmatprep.subr.mxu0 0.0
    %504 = vmatpush1.msra.mxu0 %v495
    %505 = vmatprep.subr.mxu0 0.0
    %506 = vmatpush1.msra.mxu0 %v496
    %507 = vmatprep.subr.mxu0 0.0
    %508 = vmatpush1.msra.mxu0 %v497
    %509 = vmatprep.subr.mxu0 0.0
    %510 = vmatpush1.msra.mxu0 %v498
    %511 = vmatprep.subr.mxu0 0.0
    %512 = vmatpush1.msra.mxu0 %v501
    %513 = vmatprep.subr.mxu0 0.0
    %514 = vmatpush1.msra.mxu0 0.0
    %515 = vmatprep.subr.mxu0 0.0
    %516 = vmatpush1.msra.mxu0 0.0
    %517 = vmatprep.subr.mxu0 0.0
    %518 = vmatpush1.msra.mxu0 0.0
    %519 = vmatprep.subr.mxu0 0.0
    %520 = vmatpush1.msra.mxu0 0.0
    %521 = vmatprep.subr.mxu0 0.0
    %522 = vmatpush1.msra.mxu0 0.0
    %523 = vmatprep.subr.mxu0 0.0
    %524 = vmatpush1.msra.mxu0 0.0
    %525 = vmatprep.subr.mxu0 0.0
    %526 = vmatpush1.msra.mxu0 0.0
    %527 = vmatprep.subr.mxu0 0.0
    %528 = vmatpush1.msra.mxu0 0.0
    %529 = vmatprep.subr.mxu0 0.0
    %530 = vmatpush1.msra.mxu0 0.0
    %531 = vmatprep.subr.mxu0 0.0
    %532 = vmatpush1.msra.mxu0 0.0
    %533 = vmatprep.subr.mxu0 0.0
    %534 = vmatpush1.msra.mxu0 0.0
    %535 = vmatprep.subr.mxu0 0.0
    %536 = vmatpush1.msra.mxu0 0.0
    %537 = vmatprep.subr.mxu0 0.0
    %538 = vmatpush1.msra.mxu0 0.0
    %539 = vmatprep.subr.mxu0 0.0
    %540 = vmatpush1.msra.mxu0 0.0
    %541 = vmatprep.subr.mxu0 0.0
    %542 = vmatpush1.msra.mxu0 0.0
    %543 = vmatprep.subr.mxu0 0.0
    %544 = vmatpush1.msra.mxu0 0.0
    %545 = vmatprep.subr.mxu0 0.0
    %546 = vmatpush1.msra.mxu0 0.0
    %547 = vmatprep.subr.mxu0 0.0
    %548 = vmatpush1.msra.mxu0 0.0
    %549 = vmatprep.subr.mxu0 0.0
    %550 = vmatpush1.msra.mxu0 0.0
    %551 = vmatprep.subr.mxu0 0.0
    %552 = vmatpush1.msra.mxu0 0.0
    %553 = vmatprep.subr.mxu0 0.0
    %554 = vmatpush1.msra.mxu0 0.0
    %555 = vmatprep.subr.mxu0 0.0
    %556 = vmatpush1.msra.mxu0 0.0
    %557 = vmatprep.subr.mxu0 0.0
    %558 = vmatpush1.msra.mxu0 0.0
    %559 = vmatprep.subr.mxu0 0.0
    %560 = vmatpush1.msra.mxu0 0.0
    %561 = vmatprep.subr.mxu0 0.0
    %562 = vmatpush1.msra.mxu0 0.0
    %563 = vmatprep.subr.mxu0 0.0
    %564 = vmatpush1.msra.mxu0 0.0
    %565 = vmatprep.subr.mxu0 0.0
    %566 = vmatpush1.msra.mxu0 0.0
    %567 = vmatprep.mubr.f32.mxu0 0.0
    %568 = vmatmul.mubr.f32.gmra.mrb[0].mxu0 %v54
    %v569 = vpop.f32.mrb[0].mxu0
    %v570 = vadd.f32 0.0, %v569
    %v571 = vpop.f32.mrb[0].mxu0
    %572 = vdwg.mxu0
    %s573 = scalar_lea.vmem %s2, 192
    %v574 = vld [vmem:[%s573] sm:$0xff]
    %v575 = vld [vmem:[%s573 + $0x8] sm:$0xff]
    %v576 = vld [vmem:[%s573 + $0x10] sm:$0xff]
    %v577 = vld [vmem:[%s573 + $0x18] sm:$0xff]
    %v578 = vld [vmem:[%s573 + $0x20] sm:$0xff]
    %v579 = vld [vmem:[%s573 + $0x28] sm:$0xff]
    %v580 = vld [vmem:[%s573 + $0x30] sm:$0xff]
    %v581 = vld [vmem:[%s573 + $0x38] sm:$0xff]
    %583 = vset.pattern.permute.xlu0 0
    %584 = vperm.xlu0 %583, %v574
    %v585 = vpop.permute.xlu0 %584
    %588 = vset.pattern.permute.xlu0 0
    %589 = vperm.xlu0 %588, %v575
    %v590 = vpop.permute.xlu0 %589
    %593 = vset.pattern.permute.xlu0 0
    %594 = vperm.xlu0 %593, %v576
    %v595 = vpop.permute.xlu0 %594
    %598 = vset.pattern.permute.xlu0 0
    %599 = vperm.xlu0 %598, %v577
    %v600 = vpop.permute.xlu0 %599
    %603 = vset.pattern.permute.xlu0 0
    %604 = vperm.xlu0 %603, %v578
    %v605 = vpop.permute.xlu0 %604
    %608 = vset.pattern.permute.xlu0 0
    %609 = vperm.xlu0 %608, %v579
    %v610 = vpop.permute.xlu0 %609
    %613 = vset.pattern.permute.xlu0 0
    %614 = vperm.xlu0 %613, %v580
    %v615 = vpop.permute.xlu0 %614
    %618 = vset.pattern.permute.xlu0 0
    %619 = vperm.xlu0 %618, %v581
    %v620 = vpop.permute.xlu0 %619
    %v622 = vlaneseq
    %v623 = vshrl.u32 %v622, 7
    %v624 = vsub.s32 0, %v623
    %v625 = vrot.slane %v570, %v624
    %v626 = vmul.f32 %v585, %v625
    %v627 = vmul.f32 %v590, %v625
    %v628 = vmul.f32 %v595, %v625
    %v629 = vmul.f32 %v600, %v625
    %v630 = vmul.f32 %v605, %v625
    %v631 = vmul.f32 %v610, %v625
    %v632 = vmul.f32 %v615, %v625
    %v633 = vmul.f32 %v620, %v625
    %v634 = vadd.f32 %v486, %v626
    %v635 = vadd.f32 %v487, %v627
    %v636 = vadd.f32 %v488, %v628
    %v637 = vadd.f32 %v489, %v629
    %v638 = vadd.f32 %v490, %v630
    %v639 = vadd.f32 %v491, %v631
    %v640 = vadd.f32 %v492, %v632
    %v641 = vadd.f32 %v493, %v633
    %v642 = vld [vmem:[%s3] sm:$0xff]
    %v643 = vld [vmem:[%s3 + $0x8] sm:$0xff]
    %v644 = vld [vmem:[%s3 + $0x10] sm:$0xff]
    %v645 = vld [vmem:[%s3 + $0x18] sm:$0xff]
    %v646 = vld [vmem:[%s3 + $0x20] sm:$0xff]
    %v647 = vld [vmem:[%s3 + $0x28] sm:$0xff]
    %v648 = vld [vmem:[%s3 + $0x30] sm:$0xff]
    %v649 = vld [vmem:[%s3 + $0x38] sm:$0xff]
    %651 = vset.pattern.permute.xlu0 0
    %652 = vperm.xlu0 %651, %v642
    %v653 = vpop.permute.xlu0 %652
    %656 = vset.pattern.permute.xlu0 0
    %657 = vperm.xlu0 %656, %v643
    %v658 = vpop.permute.xlu0 %657
    %661 = vset.pattern.permute.xlu0 0
    %662 = vperm.xlu0 %661, %v644
    %v663 = vpop.permute.xlu0 %662
    %666 = vset.pattern.permute.xlu0 0
    %667 = vperm.xlu0 %666, %v645
    %v668 = vpop.permute.xlu0 %667
    %671 = vset.pattern.permute.xlu0 0
    %672 = vperm.xlu0 %671, %v646
    %v673 = vpop.permute.xlu0 %672
    %676 = vset.pattern.permute.xlu0 0
    %677 = vperm.xlu0 %676, %v647
    %v678 = vpop.permute.xlu0 %677
    %681 = vset.pattern.permute.xlu0 0
    %682 = vperm.xlu0 %681, %v648
    %v683 = vpop.permute.xlu0 %682
    %686 = vset.pattern.permute.xlu0 0
    %687 = vperm.xlu0 %686, %v649
    %v688 = vpop.permute.xlu0 %687
    %v690 = vadd.f32 %v634, %v653
    %v691 = vadd.f32 %v635, %v658
    %v692 = vadd.f32 %v636, %v663
    %v693 = vadd.f32 %v637, %v668
    %v694 = vadd.f32 %v638, %v673
    %v695 = vadd.f32 %v639, %v678
    %v696 = vadd.f32 %v640, %v683
    %v697 = vadd.f32 %v641, %v688
    %v698 = vmax.f32 %v690, 0.0
    %v699 = vmax.f32 %v691, 0.0
    %v700 = vmax.f32 %v692, 0.0
    %v701 = vmax.f32 %v693, 0.0
    %v702 = vmax.f32 %v694, 0.0
    %v703 = vmax.f32 %v695, 0.0
    %v704 = vmax.f32 %v696, 0.0
    %v705 = vmax.f32 %v697, 0.0
    %v706 = vld [vmem:[%s4] sm:$0xf]
    %v707 = vld [vmem:[%s4 + $0x4] sm:$0xf]
    %v708 = vld [vmem:[%s4 + $0x8] sm:$0xf]
    %v709 = vld [vmem:[%s4 + $0xc] sm:$0xf]
    %v710 = vld [vmem:[%s4 + $0x10] sm:$0xf]
    %v711 = vld [vmem:[%s4 + $0x14] sm:$0xf]
    %v712 = vld [vmem:[%s4 + $0x18] sm:$0xf]
    %v713 = vld [vmem:[%s4 + $0x1c] sm:$0xf]
    %v714 = vld [vmem:[%s4 + $0x20] sm:$0xf]
    %v715 = vld [vmem:[%s4 + $0x24] sm:$0xf]
    %v716 = vld [vmem:[%s4 + $0x28] sm:$0xf]
    %v717 = vld [vmem:[%s4 + $0x2c] sm:$0xf]
    %v718 = vld [vmem:[%s4 + $0x30] sm:$0xf]
    %v719 = vld [vmem:[%s4 + $0x34] sm:$0xf]
    %v720 = vld [vmem:[%s4 + $0x38] sm:$0xf]
    %v721 = vld [vmem:[%s4 + $0x3c] sm:$0xf]
    %v722 = vpack.c.bf16 %v699, %v698
    %v723 = vpack.c.bf16 %v701, %v700
    %v724 = vpack.c.bf16 %v703, %v702
    %v725 = vpack.c.bf16 %v705, %v704
    %v742 = vunpack.c.l.b16 %v706
    %v743 = vunpack.c.l.b16 %v707
    %v744 = vunpack.c.l.b16 %v708
    %v745 = vunpack.c.l.b16 %v709
    %v746 = vunpack.c.l.b16 %v710
    %v747 = vunpack.c.l.b16 %v711
    %v748 = vunpack.c.l.b16 %v712
    %v749 = vunpack.c.l.b16 %v713
    %v750 = vunpack.c.l.b16 %v714
    %v751 = vunpack.c.l.b16 %v715
    %v752 = vunpack.c.l.b16 %v716
    %v753 = vunpack.c.l.b16 %v717
    %v754 = vunpack.c.l.b16 %v718
    %v755 = vunpack.c.l.b16 %v719
    %v756 = vunpack.c.l.b16 %v720
    %v757 = vunpack.c.l.b16 %v721
    %v758 = vpack.c.b16 %v743, %v742
    %v759 = vpack.c.b16 %v745, %v744
    %v760 = vpack.c.b16 %v747, %v746
    %v761 = vpack.c.b16 %v749, %v748
    %v762 = vpack.c.b16 %v751, %v750
    %v763 = vpack.c.b16 %v753, %v752
    %v764 = vpack.c.b16 %v755, %v754
    %v765 = vpack.c.b16 %v757, %v756
    %vm766 = vcmask 523264
    %v768 = vsel %vm766, %v758, 0
    %v771 = vsel %vm766, %v759, 0
    %v774 = vsel %vm766, %v760, 0
    %v777 = vsel %vm766, %v761, 0
    %v780 = vsel %vm766, %v762, 0
    %v783 = vsel %vm766, %v763, 0
    %v786 = vsel %vm766, %v764, 0
    %v789 = vsel %vm766, %v765, 0
    %791 = vmatprep.subr.bf16.mxu0 0
    %792 = vmatpush1.bf16.msra.mxu0 %v722
    %793 = vmatprep.subr.bf16.mxu0 0
    %794 = vmatpush1.bf16.msra.mxu0 %v723
    %795 = vmatprep.subr.bf16.mxu0 0
    %796 = vmatpush1.bf16.msra.mxu0 %v724
    %797 = vmatprep.subr.bf16.mxu0 0
    %798 = vmatpush1.bf16.msra.mxu0 %v725
    %799 = vmatprep.subr.bf16.mxu0 0
    %800 = vmatpush1.bf16.msra.mxu0 0
    %801 = vmatprep.subr.bf16.mxu0 0
    %802 = vmatpush1.bf16.msra.mxu0 0
    %803 = vmatprep.subr.bf16.mxu0 0
    %804 = vmatpush1.bf16.msra.mxu0 0
    %805 = vmatprep.subr.bf16.mxu0 0
    %806 = vmatpush1.bf16.msra.mxu0 0
    %807 = vmatprep.subr.bf16.mxu0 0
    %808 = vmatpush1.bf16.msra.mxu0 0
    %809 = vmatprep.subr.bf16.mxu0 0
    %810 = vmatpush1.bf16.msra.mxu0 0
    %811 = vmatprep.subr.bf16.mxu0 0
    %812 = vmatpush1.bf16.msra.mxu0 0
    %813 = vmatprep.subr.bf16.mxu0 0
    %814 = vmatpush1.bf16.msra.mxu0 0
    %815 = vmatprep.subr.bf16.mxu0 0
    %816 = vmatpush1.bf16.msra.mxu0 0
    %817 = vmatprep.subr.bf16.mxu0 0
    %818 = vmatpush1.bf16.msra.mxu0 0
    %819 = vmatprep.subr.bf16.mxu0 0
    %820 = vmatpush1.bf16.msra.mxu0 0
    %821 = vmatprep.subr.bf16.mxu0 0
    %822 = vmatpush1.bf16.msra.mxu0 0
    %823 = vmatprep.mubr.bf16.mxu0 0
    %824 = vmatmul.mubr.bf16.gmra.mrb[0].mxu0 %v768
    %v825 = vpop.f32.mrb[0].mxu0
    %v826 = vadd.f32 0.0, %v825
    %v827 = vpop.f32.mrb[0].mxu0
    %v828 = vpop.f32.mrb[0].mxu0
    %v829 = vadd.f32 0.0, %v828
    %v830 = vpop.f32.mrb[0].mxu0
    %831 = vmatprep.mubr.bf16.mxu0 0
    %832 = vmatmul.mubr.bf16.gmra.mrb[0].mxu0 %v771
    %v833 = vpop.f32.mrb[0].mxu0
    %v834 = vadd.f32 0.0, %v833
    %v835 = vpop.f32.mrb[0].mxu0
    %v836 = vpop.f32.mrb[0].mxu0
    %v837 = vadd.f32 0.0, %v836
    %v838 = vpop.f32.mrb[0].mxu0
    %839 = vmatprep.mubr.bf16.mxu0 0
    %840 = vmatmul.mubr.bf16.gmra.mrb[0].mxu0 %v774
    %v841 = vpop.f32.mrb[0].mxu0
    %v842 = vadd.f32 0.0, %v841
    %v843 = vpop.f32.mrb[0].mxu0
    %v844 = vpop.f32.mrb[0].mxu0
    %v845 = vadd.f32 0.0, %v844
    %v846 = vpop.f32.mrb[0].mxu0
    %847 = vmatprep.mubr.bf16.mxu0 0
    %848 = vmatmul.mubr.bf16.gmra.mrb[0].mxu0 %v777
    %v849 = vpop.f32.mrb[0].mxu0
    %v850 = vadd.f32 0.0, %v849
    %v851 = vpop.f32.mrb[0].mxu0
    %v852 = vpop.f32.mrb[0].mxu0
    %v853 = vadd.f32 0.0, %v852
    %v854 = vpop.f32.mrb[0].mxu0
    %855 = vmatprep.mubr.bf16.mxu0 0
    %856 = vmatmul.mubr.bf16.gmra.mrb[0].mxu0 %v780
    %v857 = vpop.f32.mrb[0].mxu0
    %v858 = vadd.f32 0.0, %v857
    %v859 = vpop.f32.mrb[0].mxu0
    %v860 = vpop.f32.mrb[0].mxu0
    %v861 = vadd.f32 0.0, %v860
    %v862 = vpop.f32.mrb[0].mxu0
    %863 = vmatprep.mubr.bf16.mxu0 0
    %864 = vmatmul.mubr.bf16.gmra.mrb[0].mxu0 %v783
    %v865 = vpop.f32.mrb[0].mxu0
    %v866 = vadd.f32 0.0, %v865
    %v867 = vpop.f32.mrb[0].mxu0
    %v868 = vpop.f32.mrb[0].mxu0
    %v869 = vadd.f32 0.0, %v868
    %v870 = vpop.f32.mrb[0].mxu0
    %871 = vmatprep.mubr.bf16.mxu0 0
    %872 = vmatmul.mubr.bf16.gmra.mrb[0].mxu0 %v786
    %v873 = vpop.f32.mrb[0].mxu0
    %v874 = vadd.f32 0.0, %v873
    %v875 = vpop.f32.mrb[0].mxu0
    %v876 = vpop.f32.mrb[0].mxu0
    %v877 = vadd.f32 0.0, %v876
    %v878 = vpop.f32.mrb[0].mxu0
    %879 = vmatprep.mubr.bf16.mxu0 0
    %880 = vmatmul.mubr.bf16.gmra.mrb[0].mxu0 %v789
    %v881 = vpop.f32.mrb[0].mxu0
    %v882 = vadd.f32 0.0, %v881
    %v883 = vpop.f32.mrb[0].mxu0
    %v884 = vpop.f32.mrb[0].mxu0
    %v885 = vadd.f32 0.0, %v884
    %v886 = vpop.f32.mrb[0].mxu0
    %887 = vdwg.mxu0
    %v888 = vld [vmem:[%s6] sm:$0xff]
    %v889 = vld [vmem:[%s6 + $0x8] sm:$0xff]
    %v890 = vld [vmem:[%s6 + $0x10] sm:$0xff]
    %v891 = vld [vmem:[%s6 + $0x18] sm:$0x1]
    %s892 = scalar_lea.vmem %s6, 32
    %v893 = vld [vmem:[%s892] sm:$0xff]
    %v894 = vld [vmem:[%s892 + $0x8] sm:$0xff]
    %v895 = vld [vmem:[%s892 + $0x10] sm:$0xff]
    %v896 = vld [vmem:[%s892 + $0x18] sm:$0x1]
    %vm897 = vcmask 203776
    %v899 = vsel %vm897, %v842, 0
    %v902 = vsel %vm897, %v845, 0
    %v905 = vsel %vm897, %v850, 0
    %v908 = vsel %vm897, %v853, 0
    %vm910 = vcmask 1040384
    %v912 = vsel %vm910, %v896, 0
    %914 = vmatprep.subr.mxu0 0.0
    %915 = vmatpush1.msra.mxu0 %v893
    %916 = vmatprep.subr.mxu0 0.0
    %917 = vmatpush1.msra.mxu0 %v894
    %918 = vmatprep.subr.mxu0 0.0
    %919 = vmatpush1.msra.mxu0 %v895
    %920 = vmatprep.subr.mxu0 0.0
    %921 = vmatpush1.msra.mxu0 %v912
    %922 = vmatprep.subr.mxu0 0.0
    %923 = vmatpush1.msra.mxu0 0.0
    %924 = vmatprep.subr.mxu0 0.0
    %925 = vmatpush1.msra.mxu0 0.0
    %926 = vmatprep.subr.mxu0 0.0
    %927 = vmatpush1.msra.mxu0 0.0
    %928 = vmatprep.subr.mxu0 0.0
    %929 = vmatpush1.msra.mxu0 0.0
    %930 = vmatprep.subr.mxu0 0.0
    %931 = vmatpush1.msra.mxu0 0.0
    %932 = vmatprep.subr.mxu0 0.0
    %933 = vmatpush1.msra.mxu0 0.0
    %934 = vmatprep.subr.mxu0 0.0
    %935 = vmatpush1.msra.mxu0 0.0
    %936 = vmatprep.subr.mxu0 0.0
    %937 = vmatpush1.msra.mxu0 0.0
    %938 = vmatprep.subr.mxu0 0.0
    %939 = vmatpush1.msra.mxu0 0.0
    %940 = vmatprep.subr.mxu0 0.0
    %941 = vmatpush1.msra.mxu0 0.0
    %942 = vmatprep.subr.mxu0 0.0
    %943 = vmatpush1.msra.mxu0 0.0
    %944 = vmatprep.subr.mxu0 0.0
    %945 = vmatpush1.msra.mxu0 0.0
    %946 = vmatprep.subr.mxu0 0.0
    %947 = vmatpush1.msra.mxu0 0.0
    %948 = vmatprep.subr.mxu0 0.0
    %949 = vmatpush1.msra.mxu0 0.0
    %950 = vmatprep.subr.mxu0 0.0
    %951 = vmatpush1.msra.mxu0 0.0
    %952 = vmatprep.subr.mxu0 0.0
    %953 = vmatpush1.msra.mxu0 0.0
    %954 = vmatprep.subr.mxu0 0.0
    %955 = vmatpush1.msra.mxu0 0.0
    %956 = vmatprep.subr.mxu0 0.0
    %957 = vmatpush1.msra.mxu0 0.0
    %958 = vmatprep.subr.mxu0 0.0
    %959 = vmatpush1.msra.mxu0 0.0
    %960 = vmatprep.subr.mxu0 0.0
    %961 = vmatpush1.msra.mxu0 0.0
    %962 = vmatprep.subr.mxu0 0.0
    %963 = vmatpush1.msra.mxu0 0.0
    %964 = vmatprep.subr.mxu0 0.0
    %965 = vmatpush1.msra.mxu0 0.0
    %966 = vmatprep.subr.mxu0 0.0
    %967 = vmatpush1.msra.mxu0 0.0
    %968 = vmatprep.subr.mxu0 0.0
    %969 = vmatpush1.msra.mxu0 0.0
    %970 = vmatprep.subr.mxu0 0.0
    %971 = vmatpush1.msra.mxu0 0.0
    %972 = vmatprep.subr.mxu0 0.0
    %973 = vmatpush1.msra.mxu0 0.0
    %974 = vmatprep.subr.mxu0 0.0
    %975 = vmatpush1.msra.mxu0 0.0
    %976 = vmatprep.subr.mxu0 0.0
    %977 = vmatpush1.msra.mxu0 0.0
    %978 = vmatprep.mubr.f32.mxu0 0.0
    %979 = vmatmul.mubr.f32.gmra.mrb[0].mxu0 %v899
    %v980 = vpop.f32.mrb[0].mxu0
    %v981 = vadd.f32 0.0, %v980
    %v982 = vpop.f32.mrb[0].mxu0
    %983 = vmatprep.mubr.f32.mxu0 0.0
    %984 = vmatmul.mubr.f32.gmra.mrb[0].mxu0 %v902
    %v985 = vpop.f32.mrb[0].mxu0
    %v986 = vadd.f32 0.0, %v985
    %v987 = vpop.f32.mrb[0].mxu0
    %988 = vmatprep.mubr.f32.mxu0 0.0
    %989 = vmatmul.mubr.f32.gmra.mrb[0].mxu0 %v905
    %v990 = vpop.f32.mrb[0].mxu0
    %v991 = vadd.f32 0.0, %v990
    %v992 = vpop.f32.mrb[0].mxu0
    %993 = vmatprep.mubr.f32.mxu0 0.0
    %994 = vmatmul.mubr.f32.gmra.mrb[0].mxu0 %v908
    %v995 = vpop.f32.mrb[0].mxu0
    %v996 = vadd.f32 0.0, %v995
    %v997 = vpop.f32.mrb[0].mxu0
    %998 = vdwg.mxu0
    %v1000 = vsel %vm897, %v826, 0
    %v1003 = vsel %vm897, %v829, 0
    %v1006 = vsel %vm897, %v834, 0
    %v1009 = vsel %vm897, %v837, 0
    %v1012 = vsel %vm910, %v891, 0
    %1014 = vmatprep.subr.mxu0 0.0
    %1015 = vmatpush1.msra.mxu0 %v888
    %1016 = vmatprep.subr.mxu0 0.0
    %1017 = vmatpush1.msra.mxu0 %v889
    %1018 = vmatprep.subr.mxu0 0.0
    %1019 = vmatpush1.msra.mxu0 %v890
    %1020 = vmatprep.subr.mxu0 0.0
    %1021 = vmatpush1.msra.mxu0 %v1012
    %1022 = vmatprep.subr.mxu0 0.0
    %1023 = vmatpush1.msra.mxu0 0.0
    %1024 = vmatprep.subr.mxu0 0.0
    %1025 = vmatpush1.msra.mxu0 0.0
    %1026 = vmatprep.subr.mxu0 0.0
    %1027 = vmatpush1.msra.mxu0 0.0
    %1028 = vmatprep.subr.mxu0 0.0
    %1029 = vmatpush1.msra.mxu0 0.0
    %1030 = vmatprep.subr.mxu0 0.0
    %1031 = vmatpush1.msra.mxu0 0.0
    %1032 = vmatprep.subr.mxu0 0.0
    %1033 = vmatpush1.msra.mxu0 0.0
    %1034 = vmatprep.subr.mxu0 0.0
    %1035 = vmatpush1.msra.mxu0 0.0
    %1036 = vmatprep.subr.mxu0 0.0
    %1037 = vmatpush1.msra.mxu0 0.0
    %1038 = vmatprep.subr.mxu0 0.0
    %1039 = vmatpush1.msra.mxu0 0.0
    %1040 = vmatprep.subr.mxu0 0.0
    %1041 = vmatpush1.msra.mxu0 0.0
    %1042 = vmatprep.subr.mxu0 0.0
    %1043 = vmatpush1.msra.mxu0 0.0
    %1044 = vmatprep.subr.mxu0 0.0
    %1045 = vmatpush1.msra.mxu0 0.0
    %1046 = vmatprep.subr.mxu0 0.0
    %1047 = vmatpush1.msra.mxu0 0.0
    %1048 = vmatprep.subr.mxu0 0.0
    %1049 = vmatpush1.msra.mxu0 0.0
    %1050 = vmatprep.subr.mxu0 0.0
    %1051 = vmatpush1.msra.mxu0 0.0
    %1052 = vmatprep.subr.mxu0 0.0
    %1053 = vmatpush1.msra.mxu0 0.0
    %1054 = vmatprep.subr.mxu0 0.0
    %1055 = vmatpush1.msra.mxu0 0.0
    %1056 = vmatprep.subr.mxu0 0.0
    %1057 = vmatpush1.msra.mxu0 0.0
    %1058 = vmatprep.subr.mxu0 0.0
    %1059 = vmatpush1.msra.mxu0 0.0
    %1060 = vmatprep.subr.mxu0 0.0
    %1061 = vmatpush1.msra.mxu0 0.0
    %1062 = vmatprep.subr.mxu0 0.0
    %1063 = vmatpush1.msra.mxu0 0.0
    %1064 = vmatprep.subr.mxu0 0.0
    %1065 = vmatpush1.msra.mxu0 0.0
    %1066 = vmatprep.subr.mxu0 0.0
    %1067 = vmatpush1.msra.mxu0 0.0
    %1068 = vmatprep.subr.mxu0 0.0
    %1069 = vmatpush1.msra.mxu0 0.0
    %1070 = vmatprep.subr.mxu0 0.0
    %1071 = vmatpush1.msra.mxu0 0.0
    %1072 = vmatprep.subr.mxu0 0.0
    %1073 = vmatpush1.msra.mxu0 0.0
    %1074 = vmatprep.subr.mxu0 0.0
    %1075 = vmatpush1.msra.mxu0 0.0
    %1076 = vmatprep.subr.mxu0 0.0
    %1077 = vmatpush1.msra.mxu0 0.0
    %1078 = vmatprep.mubr.f32.mxu0 0.0
    %1079 = vmatmul.mubr.f32.gmra.mrb[0].mxu0 %v1000
    %v1080 = vpop.f32.mrb[0].mxu0
    %v1081 = vadd.f32 %v981, %v1080
    %v1082 = vpop.f32.mrb[0].mxu0
    %1083 = vmatprep.mubr.f32.mxu0 0.0
    %1084 = vmatmul.mubr.f32.gmra.mrb[0].mxu0 %v1003
    %v1085 = vpop.f32.mrb[0].mxu0
    %v1086 = vadd.f32 %v986, %v1085
    %v1087 = vpop.f32.mrb[0].mxu0
    %1088 = vmatprep.mubr.f32.mxu0 0.0
    %1089 = vmatmul.mubr.f32.gmra.mrb[0].mxu0 %v1006
    %v1090 = vpop.f32.mrb[0].mxu0
    %v1091 = vadd.f32 %v991, %v1090
    %v1092 = vpop.f32.mrb[0].mxu0
    %1093 = vmatprep.mubr.f32.mxu0 0.0
    %1094 = vmatmul.mubr.f32.gmra.mrb[0].mxu0 %v1009
    %v1095 = vpop.f32.mrb[0].mxu0
    %v1096 = vadd.f32 %v996, %v1095
    %v1097 = vpop.f32.mrb[0].mxu0
    %1098 = vdwg.mxu0
    %s1099 = scalar_lea.vmem %s6, 64
    %v1100 = vld [vmem:[%s1099] sm:$0xff]
    %v1101 = vld [vmem:[%s1099 + $0x8] sm:$0xff]
    %v1102 = vld [vmem:[%s1099 + $0x10] sm:$0xff]
    %v1103 = vld [vmem:[%s1099 + $0x18] sm:$0x1]
    %v1105 = vsel %vm897, %v858, 0
    %v1108 = vsel %vm897, %v861, 0
    %v1111 = vsel %vm897, %v866, 0
    %v1114 = vsel %vm897, %v869, 0
    %v1117 = vsel %vm910, %v1103, 0
    %1119 = vmatprep.subr.mxu0 0.0
    %1120 = vmatpush1.msra.mxu0 %v1100
    %1121 = vmatprep.subr.mxu0 0.0
    %1122 = vmatpush1.msra.mxu0 %v1101
    %1123 = vmatprep.subr.mxu0 0.0
    %1124 = vmatpush1.msra.mxu0 %v1102
    %1125 = vmatprep.subr.mxu0 0.0
    %1126 = vmatpush1.msra.mxu0 %v1117
    %1127 = vmatprep.subr.mxu0 0.0
    %1128 = vmatpush1.msra.mxu0 0.0
    %1129 = vmatprep.subr.mxu0 0.0
    %1130 = vmatpush1.msra.mxu0 0.0
    %1131 = vmatprep.subr.mxu0 0.0
    %1132 = vmatpush1.msra.mxu0 0.0
    %1133 = vmatprep.subr.mxu0 0.0
    %1134 = vmatpush1.msra.mxu0 0.0
    %1135 = vmatprep.subr.mxu0 0.0
    %1136 = vmatpush1.msra.mxu0 0.0
    %1137 = vmatprep.subr.mxu0 0.0
    %1138 = vmatpush1.msra.mxu0 0.0
    %1139 = vmatprep.subr.mxu0 0.0
    %1140 = vmatpush1.msra.mxu0 0.0
    %1141 = vmatprep.subr.mxu0 0.0
    %1142 = vmatpush1.msra.mxu0 0.0
    %1143 = vmatprep.subr.mxu0 0.0
    %1144 = vmatpush1.msra.mxu0 0.0
    %1145 = vmatprep.subr.mxu0 0.0
    %1146 = vmatpush1.msra.mxu0 0.0
    %1147 = vmatprep.subr.mxu0 0.0
    %1148 = vmatpush1.msra.mxu0 0.0
    %1149 = vmatprep.subr.mxu0 0.0
    %1150 = vmatpush1.msra.mxu0 0.0
    %1151 = vmatprep.subr.mxu0 0.0
    %1152 = vmatpush1.msra.mxu0 0.0
    %1153 = vmatprep.subr.mxu0 0.0
    %1154 = vmatpush1.msra.mxu0 0.0
    %1155 = vmatprep.subr.mxu0 0.0
    %1156 = vmatpush1.msra.mxu0 0.0
    %1157 = vmatprep.subr.mxu0 0.0
    %1158 = vmatpush1.msra.mxu0 0.0
    %1159 = vmatprep.subr.mxu0 0.0
    %1160 = vmatpush1.msra.mxu0 0.0
    %1161 = vmatprep.subr.mxu0 0.0
    %1162 = vmatpush1.msra.mxu0 0.0
    %1163 = vmatprep.subr.mxu0 0.0
    %1164 = vmatpush1.msra.mxu0 0.0
    %1165 = vmatprep.subr.mxu0 0.0
    %1166 = vmatpush1.msra.mxu0 0.0
    %1167 = vmatprep.subr.mxu0 0.0
    %1168 = vmatpush1.msra.mxu0 0.0
    %1169 = vmatprep.subr.mxu0 0.0
    %1170 = vmatpush1.msra.mxu0 0.0
    %1171 = vmatprep.subr.mxu0 0.0
    %1172 = vmatpush1.msra.mxu0 0.0
    %1173 = vmatprep.subr.mxu0 0.0
    %1174 = vmatpush1.msra.mxu0 0.0
    %1175 = vmatprep.subr.mxu0 0.0
    %1176 = vmatpush1.msra.mxu0 0.0
    %1177 = vmatprep.subr.mxu0 0.0
    %1178 = vmatpush1.msra.mxu0 0.0
    %1179 = vmatprep.subr.mxu0 0.0
    %1180 = vmatpush1.msra.mxu0 0.0
    %1181 = vmatprep.subr.mxu0 0.0
    %1182 = vmatpush1.msra.mxu0 0.0
    %1183 = vmatprep.mubr.f32.mxu0 0.0
    %1184 = vmatmul.mubr.f32.gmra.mrb[0].mxu0 %v1105
    %v1185 = vpop.f32.mrb[0].mxu0
    %v1186 = vadd.f32 0.0, %v1185
    %v1187 = vpop.f32.mrb[0].mxu0
    %1188 = vmatprep.mubr.f32.mxu0 0.0
    %1189 = vmatmul.mubr.f32.gmra.mrb[0].mxu0 %v1108
    %v1190 = vpop.f32.mrb[0].mxu0
    %v1191 = vadd.f32 0.0, %v1190
    %v1192 = vpop.f32.mrb[0].mxu0
    %1193 = vmatprep.mubr.f32.mxu0 0.0
    %1194 = vmatmul.mubr.f32.gmra.mrb[0].mxu0 %v1111
    %v1195 = vpop.f32.mrb[0].mxu0
    %v1196 = vadd.f32 0.0, %v1195
    %v1197 = vpop.f32.mrb[0].mxu0
    %1198 = vmatprep.mubr.f32.mxu0 0.0
    %1199 = vmatmul.mubr.f32.gmra.mrb[0].mxu0 %v1114
    %v1200 = vpop.f32.mrb[0].mxu0
    %v1201 = vadd.f32 0.0, %v1200
    %v1202 = vpop.f32.mrb[0].mxu0
    %1203 = vdwg.mxu0
    %v1204 = vadd.f32 %v1081, %v1186
    %v1205 = vadd.f32 %v1086, %v1191
    %v1206 = vadd.f32 %v1091, %v1196
    %v1207 = vadd.f32 %v1096, %v1201
    %s1208 = scalar_lea.vmem %s6, 96
    %v1209 = vld [vmem:[%s1208] sm:$0xff]
    %v1210 = vld [vmem:[%s1208 + $0x8] sm:$0xff]
    %v1211 = vld [vmem:[%s1208 + $0x10] sm:$0xff]
    %v1212 = vld [vmem:[%s1208 + $0x18] sm:$0x1]
    %v1214 = vsel %vm897, %v874, 0
    %v1217 = vsel %vm897, %v877, 0
    %v1220 = vsel %vm897, %v882, 0
    %v1223 = vsel %vm897, %v885, 0
    %v1226 = vsel %vm910, %v1212, 0
    %1228 = vmatprep.subr.mxu0 0.0
    %1229 = vmatpush1.msra.mxu0 %v1209
    %1230 = vmatprep.subr.mxu0 0.0
    %1231 = vmatpush1.msra.mxu0 %v1210
    %1232 = vmatprep.subr.mxu0 0.0
    %1233 = vmatpush1.msra.mxu0 %v1211
    %1234 = vmatprep.subr.mxu0 0.0
    %1235 = vmatpush1.msra.mxu0 %v1226
    %1236 = vmatprep.subr.mxu0 0.0
    %1237 = vmatpush1.msra.mxu0 0.0
    %1238 = vmatprep.subr.mxu0 0.0
    %1239 = vmatpush1.msra.mxu0 0.0
    %1240 = vmatprep.subr.mxu0 0.0
    %1241 = vmatpush1.msra.mxu0 0.0
    %1242 = vmatprep.subr.mxu0 0.0
    %1243 = vmatpush1.msra.mxu0 0.0
    %1244 = vmatprep.subr.mxu0 0.0
    %1245 = vmatpush1.msra.mxu0 0.0
    %1246 = vmatprep.subr.mxu0 0.0
    %1247 = vmatpush1.msra.mxu0 0.0
    %1248 = vmatprep.subr.mxu0 0.0
    %1249 = vmatpush1.msra.mxu0 0.0
    %1250 = vmatprep.subr.mxu0 0.0
    %1251 = vmatpush1.msra.mxu0 0.0
    %1252 = vmatprep.subr.mxu0 0.0
    %1253 = vmatpush1.msra.mxu0 0.0
    %1254 = vmatprep.subr.mxu0 0.0
    %1255 = vmatpush1.msra.mxu0 0.0
    %1256 = vmatprep.subr.mxu0 0.0
    %1257 = vmatpush1.msra.mxu0 0.0
    %1258 = vmatprep.subr.mxu0 0.0
    %1259 = vmatpush1.msra.mxu0 0.0
    %1260 = vmatprep.subr.mxu0 0.0
    %1261 = vmatpush1.msra.mxu0 0.0
    %1262 = vmatprep.subr.mxu0 0.0
    %1263 = vmatpush1.msra.mxu0 0.0
    %1264 = vmatprep.subr.mxu0 0.0
    %1265 = vmatpush1.msra.mxu0 0.0
    %1266 = vmatprep.subr.mxu0 0.0
    %1267 = vmatpush1.msra.mxu0 0.0
    %1268 = vmatprep.subr.mxu0 0.0
    %1269 = vmatpush1.msra.mxu0 0.0
    %1270 = vmatprep.subr.mxu0 0.0
    %1271 = vmatpush1.msra.mxu0 0.0
    %1272 = vmatprep.subr.mxu0 0.0
    %1273 = vmatpush1.msra.mxu0 0.0
    %1274 = vmatprep.subr.mxu0 0.0
    %1275 = vmatpush1.msra.mxu0 0.0
    %1276 = vmatprep.subr.mxu0 0.0
    %1277 = vmatpush1.msra.mxu0 0.0
    %1278 = vmatprep.subr.mxu0 0.0
    %1279 = vmatpush1.msra.mxu0 0.0
    %1280 = vmatprep.subr.mxu0 0.0
    %1281 = vmatpush1.msra.mxu0 0.0
    %1282 = vmatprep.subr.mxu0 0.0
    %1283 = vmatpush1.msra.mxu0 0.0
    %1284 = vmatprep.subr.mxu0 0.0
    %1285 = vmatpush1.msra.mxu0 0.0
    %1286 = vmatprep.subr.mxu0 0.0
    %1287 = vmatpush1.msra.mxu0 0.0
    %1288 = vmatprep.subr.mxu0 0.0
    %1289 = vmatpush1.msra.mxu0 0.0
    %1290 = vmatprep.subr.mxu0 0.0
    %1291 = vmatpush1.msra.mxu0 0.0
    %1292 = vmatprep.mubr.f32.mxu0 0.0
    %1293 = vmatmul.mubr.f32.gmra.mrb[0].mxu0 %v1214
    %v1294 = vpop.f32.mrb[0].mxu0
    %v1295 = vadd.f32 0.0, %v1294
    %v1296 = vpop.f32.mrb[0].mxu0
    %1297 = vmatprep.mubr.f32.mxu0 0.0
    %1298 = vmatmul.mubr.f32.gmra.mrb[0].mxu0 %v1217
    %v1299 = vpop.f32.mrb[0].mxu0
    %v1300 = vadd.f32 0.0, %v1299
    %v1301 = vpop.f32.mrb[0].mxu0
    %1302 = vmatprep.mubr.f32.mxu0 0.0
    %1303 = vmatmul.mubr.f32.gmra.mrb[0].mxu0 %v1220
    %v1304 = vpop.f32.mrb[0].mxu0
    %v1305 = vadd.f32 0.0, %v1304
    %v1306 = vpop.f32.mrb[0].mxu0
    %1307 = vmatprep.mubr.f32.mxu0 0.0
    %1308 = vmatmul.mubr.f32.gmra.mrb[0].mxu0 %v1223
    %v1309 = vpop.f32.mrb[0].mxu0
    %v1310 = vadd.f32 0.0, %v1309
    %v1311 = vpop.f32.mrb[0].mxu0
    %1312 = vdwg.mxu0
    %v1313 = vadd.f32 %v1204, %v1295
    %v1314 = vadd.f32 %v1205, %v1300
    %v1315 = vadd.f32 %v1206, %v1305
    %v1316 = vadd.f32 %v1207, %v1310
    %v1317 = vld [vmem:[%s5] sm:$0xff]
    %v1318 = vld [vmem:[%s5 + $0x8] sm:$0xff]
    %v1319 = vld [vmem:[%s5 + $0x10] sm:$0xff]
    %v1320 = vld [vmem:[%s5 + $0x18] sm:$0xff]
    %1322 = vset.pattern.permute.xlu0 0
    %1323 = vperm.xlu0 %1322, %v1317
    %v1324 = vpop.permute.xlu0 %1323
    %1327 = vset.pattern.permute.xlu0 0
    %1328 = vperm.xlu0 %1327, %v1318
    %v1329 = vpop.permute.xlu0 %1328
    %1332 = vset.pattern.permute.xlu0 0
    %1333 = vperm.xlu0 %1332, %v1319
    %v1334 = vpop.permute.xlu0 %1333
    %1337 = vset.pattern.permute.xlu0 0
    %1338 = vperm.xlu0 %1337, %v1320
    %v1339 = vpop.permute.xlu0 %1338
    %v1341 = vadd.f32 %v1313, %v1324
    %v1342 = vadd.f32 %v1314, %v1329
    %v1343 = vadd.f32 %v1315, %v1334
    %v1344 = vadd.f32 %v1316, %v1339
    %v1345 = vmax.f32 %v1341, 0.0
    %v1346 = vmax.f32 %v1342, 0.0
    %v1347 = vmax.f32 %v1343, 0.0
    %v1348 = vmax.f32 %v1344, 0.0
    %v1349 = vlaneseq
    %v1350 = vand.u32 %v1349, 127
    %v1351 = vadd.s32 %v1350, 128
    %v1352 = vadd.s32 %v1350, 256
    %v1353 = vadd.s32 %v1350, 384
    %v1354 = vlaneseq
    %v1355 = vshrl.u32 %v1354, 7
    %v1356 = vadd.s32 %v1355, 8
    %v1357 = vand.u32 %v1350, 15
    %v1358 = vand.u32 %v1351, 15
    %v1359 = vand.u32 %v1352, 15
    %v1360 = vand.u32 %v1353, 15
    %vm1361 = vcmp.eq.s32.totalorder %v1357, %v1355
    %vm1362 = vcmp.eq.s32.totalorder %v1358, %v1355
    %vm1363 = vcmp.eq.s32.totalorder %v1359, %v1355
    %vm1364 = vcmp.eq.s32.totalorder %v1360, %v1355
    %vm1365 = vcmp.eq.s32.totalorder %v1357, %v1356
    %vm1366 = vcmp.eq.s32.totalorder %v1358, %v1356
    %vm1367 = vcmp.eq.s32.totalorder %v1359, %v1356
    %vm1368 = vcmp.eq.s32.totalorder %v1360, %v1356
    %v1369 = vsel %vm1361, 1.0, 0.0
    %v1370 = vsel %vm1362, 1.0, 0.0
    %v1371 = vsel %vm1363, 1.0, 0.0
    %v1372 = vsel %vm1364, 1.0, 0.0
    %v1373 = vsel %vm1365, 1.0, 0.0
    %v1374 = vsel %vm1366, 1.0, 0.0
    %v1375 = vsel %vm1367, 1.0, 0.0
    %v1376 = vsel %vm1368, 1.0, 0.0
    %vm1377 = vcmask 130048
    %v1379 = vsel %vm1377, %v1345, 0
    %v1382 = vsel %vm1377, %v1346, 0
    %v1385 = vsel %vm1377, %v1347, 0
    %v1388 = vsel %vm1377, %v1348, 0
    %1390 = vmatprep.subr.mxu0 %v1370
    %1391 = vmatpush1.msra.mxu0 %v1369
    %1392 = vmatprep.subr.mxu0 %v1374
    %1393 = vmatpush1.msra.mxu0 %v1373
    %1394 = vmatprep.subr.mxu0 0.0
    %1395 = vmatpush1.msra.mxu0 0.0
    %1396 = vmatprep.subr.mxu0 0.0
    %1397 = vmatpush1.msra.mxu0 0.0
    %1398 = vmatprep.subr.mxu0 0.0
    %1399 = vmatpush1.msra.mxu0 0.0
    %1400 = vmatprep.subr.mxu0 0.0
    %1401 = vmatpush1.msra.mxu0 0.0
    %1402 = vmatprep.subr.mxu0 0.0
    %1403 = vmatpush1.msra.mxu0 0.0
    %1404 = vmatprep.subr.mxu0 0.0
    %1405 = vmatpush1.msra.mxu0 0.0
    %1406 = vmatprep.subr.mxu0 0.0
    %1407 = vmatpush1.msra.mxu0 0.0
    %1408 = vmatprep.subr.mxu0 0.0
    %1409 = vmatpush1.msra.mxu0 0.0
    %1410 = vmatprep.subr.mxu0 0.0
    %1411 = vmatpush1.msra.mxu0 0.0
    %1412 = vmatprep.subr.mxu0 0.0
    %1413 = vmatpush1.msra.mxu0 0.0
    %1414 = vmatprep.subr.mxu0 0.0
    %1415 = vmatpush1.msra.mxu0 0.0
    %1416 = vmatprep.subr.mxu0 0.0
    %1417 = vmatpush1.msra.mxu0 0.0
    %1418 = vmatprep.subr.mxu0 0.0
    %1419 = vmatpush1.msra.mxu0 0.0
    %1420 = vmatprep.subr.mxu0 0.0
    %1421 = vmatpush1.msra.mxu0 0.0
    %1422 = vmatprep.subr.mxu0 0.0
    %1423 = vmatpush1.msra.mxu0 0.0
    %1424 = vmatprep.subr.mxu0 0.0
    %1425 = vmatpush1.msra.mxu0 0.0
    %1426 = vmatprep.subr.mxu0 0.0
    %1427 = vmatpush1.msra.mxu0 0.0
    %1428 = vmatprep.subr.mxu0 0.0
    %1429 = vmatpush1.msra.mxu0 0.0
    %1430 = vmatprep.subr.mxu0 0.0
    %1431 = vmatpush1.msra.mxu0 0.0
    %1432 = vmatprep.subr.mxu0 0.0
    %1433 = vmatpush1.msra.mxu0 0.0
    %1434 = vmatprep.subr.mxu0 0.0
    %1435 = vmatpush1.msra.mxu0 0.0
    %1436 = vmatprep.subr.mxu0 0.0
    %1437 = vmatpush1.msra.mxu0 0.0
    %1438 = vmatprep.subr.mxu0 0.0
    %1439 = vmatpush1.msra.mxu0 0.0
    %1440 = vmatprep.subr.mxu0 0.0
    %1441 = vmatpush1.msra.mxu0 0.0
    %1442 = vmatprep.subr.mxu0 0.0
    %1443 = vmatpush1.msra.mxu0 0.0
    %1444 = vmatprep.subr.mxu0 0.0
    %1445 = vmatpush1.msra.mxu0 0.0
    %1446 = vmatprep.subr.mxu0 0.0
    %1447 = vmatpush1.msra.mxu0 0.0
    %1448 = vmatprep.subr.mxu0 0.0
    %1449 = vmatpush1.msra.mxu0 0.0
    %1450 = vmatprep.subr.mxu0 0.0
    %1451 = vmatpush1.msra.mxu0 0.0
    %1452 = vmatprep.subr.mxu0 0.0
    %1453 = vmatpush1.msra.mxu0 0.0
    %1454 = vmatprep.mubr.f32.mxu0 0.0
    %1455 = vmatmul.mubr.f32.gmra.mrb[0].mxu0 %v1379
    %v1456 = vpop.f32.mrb[0].mxu0
    %v1457 = vadd.f32 0.0, %v1456
    %v1458 = vpop.f32.mrb[0].mxu0
    %v1459 = vadd.f32 0.0, %v1458
    %1460 = vmatprep.mubr.f32.mxu0 0.0
    %1461 = vmatmul.mubr.f32.gmra.mrb[0].mxu0 %v1382
    %v1462 = vpop.f32.mrb[0].mxu0
    %v1463 = vadd.f32 0.0, %v1462
    %v1464 = vpop.f32.mrb[0].mxu0
    %v1465 = vadd.f32 0.0, %v1464
    %1466 = vmatprep.mubr.f32.mxu0 0.0
    %1467 = vmatmul.mubr.f32.gmra.mrb[0].mxu0 %v1385
    %v1468 = vpop.f32.mrb[0].mxu0
    %v1469 = vadd.f32 0.0, %v1468
    %v1470 = vpop.f32.mrb[0].mxu0
    %v1471 = vadd.f32 0.0, %v1470
    %1472 = vmatprep.mubr.f32.mxu0 0.0
    %1473 = vmatmul.mubr.f32.gmra.mrb[0].mxu0 %v1388
    %v1474 = vpop.f32.mrb[0].mxu0
    %v1475 = vadd.f32 0.0, %v1474
    %v1476 = vpop.f32.mrb[0].mxu0
    %v1477 = vadd.f32 0.0, %v1476
    %1478 = vdwg.mxu0
    %1479 = vmatprep.subr.mxu0 %v1372
    %1480 = vmatpush1.msra.mxu0 %v1371
    %1481 = vmatprep.subr.mxu0 %v1376
    %1482 = vmatpush1.msra.mxu0 %v1375
    %1483 = vmatprep.subr.mxu0 0.0
    %1484 = vmatpush1.msra.mxu0 0.0
    %1485 = vmatprep.subr.mxu0 0.0
    %1486 = vmatpush1.msra.mxu0 0.0
    %1487 = vmatprep.subr.mxu0 0.0
    %1488 = vmatpush1.msra.mxu0 0.0
    %1489 = vmatprep.subr.mxu0 0.0
    %1490 = vmatpush1.msra.mxu0 0.0
    %1491 = vmatprep.subr.mxu0 0.0
    %1492 = vmatpush1.msra.mxu0 0.0
    %1493 = vmatprep.subr.mxu0 0.0
    %1494 = vmatpush1.msra.mxu0 0.0
    %1495 = vmatprep.subr.mxu0 0.0
    %1496 = vmatpush1.msra.mxu0 0.0
    %1497 = vmatprep.subr.mxu0 0.0
    %1498 = vmatpush1.msra.mxu0 0.0
    %1499 = vmatprep.subr.mxu0 0.0
    %1500 = vmatpush1.msra.mxu0 0.0
    %1501 = vmatprep.subr.mxu0 0.0
    %1502 = vmatpush1.msra.mxu0 0.0
    %1503 = vmatprep.subr.mxu0 0.0
    %1504 = vmatpush1.msra.mxu0 0.0
    %1505 = vmatprep.subr.mxu0 0.0
    %1506 = vmatpush1.msra.mxu0 0.0
    %1507 = vmatprep.subr.mxu0 0.0
    %1508 = vmatpush1.msra.mxu0 0.0
    %1509 = vmatprep.subr.mxu0 0.0
    %1510 = vmatpush1.msra.mxu0 0.0
    %1511 = vmatprep.subr.mxu0 0.0
    %1512 = vmatpush1.msra.mxu0 0.0
    %1513 = vmatprep.subr.mxu0 0.0
    %1514 = vmatpush1.msra.mxu0 0.0
    %1515 = vmatprep.subr.mxu0 0.0
    %1516 = vmatpush1.msra.mxu0 0.0
    %1517 = vmatprep.subr.mxu0 0.0
    %1518 = vmatpush1.msra.mxu0 0.0
    %1519 = vmatprep.subr.mxu0 0.0
    %1520 = vmatpush1.msra.mxu0 0.0
    %1521 = vmatprep.subr.mxu0 0.0
    %1522 = vmatpush1.msra.mxu0 0.0
    %1523 = vmatprep.subr.mxu0 0.0
    %1524 = vmatpush1.msra.mxu0 0.0
    %1525 = vmatprep.subr.mxu0 0.0
    %1526 = vmatpush1.msra.mxu0 0.0
    %1527 = vmatprep.subr.mxu0 0.0
    %1528 = vmatpush1.msra.mxu0 0.0
    %1529 = vmatprep.subr.mxu0 0.0
    %1530 = vmatpush1.msra.mxu0 0.0
    %1531 = vmatprep.subr.mxu0 0.0
    %1532 = vmatpush1.msra.mxu0 0.0
    %1533 = vmatprep.subr.mxu0 0.0
    %1534 = vmatpush1.msra.mxu0 0.0
    %1535 = vmatprep.subr.mxu0 0.0
    %1536 = vmatpush1.msra.mxu0 0.0
    %1537 = vmatprep.subr.mxu0 0.0
    %1538 = vmatpush1.msra.mxu0 0.0
    %1539 = vmatprep.subr.mxu0 0.0
    %1540 = vmatpush1.msra.mxu0 0.0
    %1541 = vmatprep.subr.mxu0 0.0
    %1542 = vmatpush1.msra.mxu0 0.0
    %1543 = vmatprep.mubr.f32.mxu0 0.0
    %1544 = vmatmul.mubr.f32.gmra.mrb[0].mxu0 %v1379
    %v1545 = vpop.f32.mrb[0].mxu0
    %v1546 = vadd.f32 0.0, %v1545
    %v1547 = vpop.f32.mrb[0].mxu0
    %v1548 = vadd.f32 0.0, %v1547
    %1549 = vmatprep.mubr.f32.mxu0 0.0
    %1550 = vmatmul.mubr.f32.gmra.mrb[0].mxu0 %v1382
    %v1551 = vpop.f32.mrb[0].mxu0
    %v1552 = vadd.f32 0.0, %v1551
    %v1553 = vpop.f32.mrb[0].mxu0
    %v1554 = vadd.f32 0.0, %v1553
    %1555 = vmatprep.mubr.f32.mxu0 0.0
    %1556 = vmatmul.mubr.f32.gmra.mrb[0].mxu0 %v1385
    %v1557 = vpop.f32.mrb[0].mxu0
    %v1558 = vadd.f32 0.0, %v1557
    %v1559 = vpop.f32.mrb[0].mxu0
    %v1560 = vadd.f32 0.0, %v1559
    %1561 = vmatprep.mubr.f32.mxu0 0.0
    %1562 = vmatmul.mubr.f32.gmra.mrb[0].mxu0 %v1388
    %v1563 = vpop.f32.mrb[0].mxu0
    %v1564 = vadd.f32 0.0, %v1563
    %v1565 = vpop.f32.mrb[0].mxu0
    %v1566 = vadd.f32 0.0, %v1565
    %1567 = vdwg.mxu0
    %v1568 = vadd.s32 %v1355, 16
    %v1569 = vadd.s32 %v1355, 24
    %v1570 = vmul.u32 %v1355, 16
    %v1571 = vmul.u32 %v1356, 16
    %v1572 = vmul.u32 %v1568, 16
    %v1573 = vmul.u32 %v1569, 16
    %vm1574 = vcmp.ge.s32.totalorder %v1350, %v1570
    %vm1575 = vcmp.ge.s32.totalorder %v1351, %v1570
    %vm1576 = vcmp.ge.s32.totalorder %v1352, %v1570
    %vm1577 = vcmp.ge.s32.totalorder %v1353, %v1570
    %vm1578 = vcmp.ge.s32.totalorder %v1350, %v1571
    %vm1579 = vcmp.ge.s32.totalorder %v1351, %v1571
    %vm1580 = vcmp.ge.s32.totalorder %v1352, %v1571
    %vm1581 = vcmp.ge.s32.totalorder %v1353, %v1571
    %vm1582 = vcmp.ge.s32.totalorder %v1350, %v1572
    %vm1583 = vcmp.ge.s32.totalorder %v1351, %v1572
    %vm1584 = vcmp.ge.s32.totalorder %v1352, %v1572
    %vm1585 = vcmp.ge.s32.totalorder %v1353, %v1572
    %vm1586 = vcmp.ge.s32.totalorder %v1350, %v1573
    %vm1587 = vcmp.ge.s32.totalorder %v1351, %v1573
    %vm1588 = vcmp.ge.s32.totalorder %v1352, %v1573
    %vm1589 = vcmp.ge.s32.totalorder %v1353, %v1573
    %v1590 = vadd.s32 %v1570, 16
    %v1591 = vadd.s32 %v1571, 16
    %v1592 = vadd.s32 %v1572, 16
    %v1593 = vadd.s32 %v1573, 16
    %vm1594 = vcmp.lt.s32.totalorder %v1350, %v1590
    %vm1595 = vcmp.lt.s32.totalorder %v1351, %v1590
    %vm1596 = vcmp.lt.s32.totalorder %v1352, %v1590
    %vm1597 = vcmp.lt.s32.totalorder %v1353, %v1590
    %vm1598 = vcmp.lt.s32.totalorder %v1350, %v1591
    %vm1599 = vcmp.lt.s32.totalorder %v1351, %v1591
    %vm1600 = vcmp.lt.s32.totalorder %v1352, %v1591
    %vm1601 = vcmp.lt.s32.totalorder %v1353, %v1591
    %vm1602 = vcmp.lt.s32.totalorder %v1350, %v1592
    %vm1603 = vcmp.lt.s32.totalorder %v1351, %v1592
    %vm1604 = vcmp.lt.s32.totalorder %v1352, %v1592
    %vm1605 = vcmp.lt.s32.totalorder %v1353, %v1592
    %vm1606 = vcmp.lt.s32.totalorder %v1350, %v1593
    %vm1607 = vcmp.lt.s32.totalorder %v1351, %v1593
    %vm1608 = vcmp.lt.s32.totalorder %v1352, %v1593
    %vm1609 = vcmp.lt.s32.totalorder %v1353, %v1593
    %vm1610 = vmand %vm1574, %vm1594
    %vm1611 = vmand %vm1575, %vm1595
    %vm1612 = vmand %vm1576, %vm1596
    %vm1613 = vmand %vm1577, %vm1597
    %vm1614 = vmand %vm1578, %vm1598
    %vm1615 = vmand %vm1579, %vm1599
    %vm1616 = vmand %vm1580, %vm1600
    %vm1617 = vmand %vm1581, %vm1601
    %vm1618 = vmand %vm1582, %vm1602
    %vm1619 = vmand %vm1583, %vm1603
    %vm1620 = vmand %vm1584, %vm1604
    %vm1621 = vmand %vm1585, %vm1605
    %vm1622 = vmand %vm1586, %vm1606
    %vm1623 = vmand %vm1587, %vm1607
    %vm1624 = vmand %vm1588, %vm1608
    %vm1625 = vmand %vm1589, %vm1609
    %v1626 = vsel %vm1610, %v1457, 0.0
    %v1627 = vsel %vm1611, %v1459, 0.0
    %v1628 = vsel %vm1612, %v1546, 0.0
    %v1629 = vsel %vm1613, %v1548, 0.0
    %v1630 = vsel %vm1614, %v1463, 0.0
    %v1631 = vsel %vm1615, %v1465, 0.0
    %v1632 = vsel %vm1616, %v1552, 0.0
    %v1633 = vsel %vm1617, %v1554, 0.0
    %v1634 = vsel %vm1618, %v1469, 0.0
    %v1635 = vsel %vm1619, %v1471, 0.0
    %v1636 = vsel %vm1620, %v1558, 0.0
    %v1637 = vsel %vm1621, %v1560, 0.0
    %v1638 = vsel %vm1622, %v1475, 0.0
    %v1639 = vsel %vm1623, %v1477, 0.0
    %v1640 = vsel %vm1624, %v1564, 0.0
    %v1641 = vsel %vm1625, %v1566, 0.0
    %v1642 = vadd.f32 %v1626, %v1630
    %v1643 = vadd.f32 %v1642, %v1634
    %v1644 = vadd.f32 %v1643, %v1638
    %v1645 = vrot.slane %v1644, 4
    %v1646 = vadd.f32 %v1644, %v1645
    %v1647 = vrot.slane %v1646, 2
    %v1648 = vadd.f32 %v1646, %v1647
    %v1649 = vrot.slane %v1648, 1
    %v1650 = vadd.f32 %v1648, %v1649
    %v1651 = vadd.f32 %v1627, %v1631
    %v1652 = vadd.f32 %v1651, %v1635
    %v1653 = vadd.f32 %v1652, %v1639
    %v1654 = vrot.slane %v1653, 4
    %v1655 = vadd.f32 %v1653, %v1654
    %v1656 = vrot.slane %v1655, 2
    %v1657 = vadd.f32 %v1655, %v1656
    %v1658 = vrot.slane %v1657, 1
    %v1659 = vadd.f32 %v1657, %v1658
    %v1660 = vadd.f32 %v1628, %v1632
    %v1661 = vadd.f32 %v1660, %v1636
    %v1662 = vadd.f32 %v1661, %v1640
    %v1663 = vrot.slane %v1662, 4
    %v1664 = vadd.f32 %v1662, %v1663
    %v1665 = vrot.slane %v1664, 2
    %v1666 = vadd.f32 %v1664, %v1665
    %v1667 = vrot.slane %v1666, 1
    %v1668 = vadd.f32 %v1666, %v1667
    %v1669 = vadd.f32 %v1629, %v1633
    %v1670 = vadd.f32 %v1669, %v1637
    %v1671 = vadd.f32 %v1670, %v1641
    %v1672 = vrot.slane %v1671, 4
    %v1673 = vadd.f32 %v1671, %v1672
    %v1674 = vrot.slane %v1673, 2
    %v1675 = vadd.f32 %v1673, %v1674
    %v1676 = vrot.slane %v1675, 1
    %v1677 = vadd.f32 %v1675, %v1676
    %v1678 = vpack.c.bf16 %v1650, %v1650
    %v1679 = vpack.c.bf16 %v1659, %v1659
    %v1680 = vpack.c.bf16 %v1668, %v1668
    %v1681 = vpack.c.bf16 %v1677, %v1677
    %v1682 = vld [vmem:[%s7] sm:$0xf]
    %v1683 = vld [vmem:[%s7 + $0x4] sm:$0xf]
    %v1684 = vld [vmem:[%s7 + $0x8] sm:$0xf]
    %v1685 = vld [vmem:[%s7 + $0xc] sm:$0xf]
    %v1686 = vld [vmem:[%s7 + $0x10] sm:$0xf]
    %v1687 = vld [vmem:[%s7 + $0x14] sm:$0xf]
    %v1688 = vld [vmem:[%s7 + $0x18] sm:$0xf]
    %v1689 = vld [vmem:[%s7 + $0x1c] sm:$0xf]
    %v1690 = vld [vmem:[%s7 + $0x20] sm:$0xf]
    %v1691 = vld [vmem:[%s7 + $0x24] sm:$0xf]
    %v1692 = vld [vmem:[%s7 + $0x28] sm:$0xf]
    %v1693 = vld [vmem:[%s7 + $0x2c] sm:$0xf]
    %v1694 = vld [vmem:[%s7 + $0x30] sm:$0xf]
    %v1695 = vld [vmem:[%s7 + $0x34] sm:$0xf]
    %v1696 = vld [vmem:[%s7 + $0x38] sm:$0xf]
    %v1697 = vld [vmem:[%s7 + $0x3c] sm:$0xf]
    %v1698 = vld [vmem:[%s7 + $0x40] sm:$0xf]
    %v1699 = vld [vmem:[%s7 + $0x44] sm:$0xf]
    %v1700 = vld [vmem:[%s7 + $0x48] sm:$0xf]
    %v1701 = vld [vmem:[%s7 + $0x4c] sm:$0xf]
    %v1702 = vld [vmem:[%s7 + $0x50] sm:$0xf]
    %v1703 = vld [vmem:[%s7 + $0x54] sm:$0xf]
    %v1704 = vld [vmem:[%s7 + $0x58] sm:$0xf]
    %v1705 = vld [vmem:[%s7 + $0x5c] sm:$0xf]
    %v1706 = vld [vmem:[%s7 + $0x60] sm:$0xf]
    %v1707 = vld [vmem:[%s7 + $0x64] sm:$0xf]
    %v1708 = vld [vmem:[%s7 + $0x68] sm:$0xf]
    %v1709 = vld [vmem:[%s7 + $0x6c] sm:$0xf]
    %v1710 = vld [vmem:[%s7 + $0x70] sm:$0xf]
    %v1711 = vld [vmem:[%s7 + $0x74] sm:$0xf]
    %v1712 = vld [vmem:[%s7 + $0x78] sm:$0xf]
    %v1713 = vld [vmem:[%s7 + $0x7c] sm:$0xf]
    %v1714 = vld [vmem:[%s7 + $0x80] sm:$0xf]
    %v1715 = vld [vmem:[%s7 + $0x84] sm:$0xf]
    %v1716 = vld [vmem:[%s7 + $0x88] sm:$0xf]
    %v1717 = vld [vmem:[%s7 + $0x8c] sm:$0xf]
    %v1718 = vld [vmem:[%s7 + $0x90] sm:$0xf]
    %v1719 = vld [vmem:[%s7 + $0x94] sm:$0xf]
    %v1720 = vld [vmem:[%s7 + $0x98] sm:$0xf]
    %v1721 = vld [vmem:[%s7 + $0x9c] sm:$0xf]
    %v1722 = vld [vmem:[%s7 + $0xa0] sm:$0xf]
    %v1723 = vld [vmem:[%s7 + $0xa4] sm:$0xf]
    %v1724 = vld [vmem:[%s7 + $0xa8] sm:$0xf]
    %v1725 = vld [vmem:[%s7 + $0xac] sm:$0xf]
    %v1726 = vld [vmem:[%s7 + $0xb0] sm:$0xf]
    %v1727 = vld [vmem:[%s7 + $0xb4] sm:$0xf]
    %v1728 = vld [vmem:[%s7 + $0xb8] sm:$0xf]
    %v1729 = vld [vmem:[%s7 + $0xbc] sm:$0xf]
    %v1730 = vld [vmem:[%s7 + $0xc0] sm:$0xf]
    %v1731 = vld [vmem:[%s7 + $0xc4] sm:$0xf]
    %v1732 = vld [vmem:[%s7 + $0xc8] sm:$0xf]
    %v1733 = vld [vmem:[%s7 + $0xcc] sm:$0xf]
    %v1734 = vld [vmem:[%s7 + $0xd0] sm:$0xf]
    %v1735 = vld [vmem:[%s7 + $0xd4] sm:$0xf]
    %v1736 = vld [vmem:[%s7 + $0xd8] sm:$0xf]
    %v1737 = vld [vmem:[%s7 + $0xdc] sm:$0xf]
    %v1738 = vld [vmem:[%s7 + $0xe0] sm:$0xf]
    %v1739 = vld [vmem:[%s7 + $0xe4] sm:$0xf]
    %v1740 = vld [vmem:[%s7 + $0xe8] sm:$0xf]
    %v1741 = vld [vmem:[%s7 + $0xec] sm:$0xf]
    %v1742 = vld [vmem:[%s7 + $0xf0] sm:$0xf]
    %v1743 = vld [vmem:[%s7 + $0xf4] sm:$0xf]
    %v1744 = vld [vmem:[%s7 + $0xf8] sm:$0xf]
    %v1745 = vld [vmem:[%s7 + $0xfc] sm:$0xf]
    %v1746 = vld [vmem:[%s8] sm:$0x1]
    %v1811 = vunpack.c.l.b16 %v1682
    %v1812 = vunpack.c.l.b16 %v1683
    %v1813 = vunpack.c.l.b16 %v1684
    %v1814 = vunpack.c.l.b16 %v1685
    %v1815 = vunpack.c.l.b16 %v1686
    %v1816 = vunpack.c.l.b16 %v1687
    %v1817 = vunpack.c.l.b16 %v1688
    %v1818 = vunpack.c.l.b16 %v1689
    %v1819 = vunpack.c.l.b16 %v1690
    %v1820 = vunpack.c.l.b16 %v1691
    %v1821 = vunpack.c.l.b16 %v1692
    %v1822 = vunpack.c.l.b16 %v1693
    %v1823 = vunpack.c.l.b16 %v1694
    %v1824 = vunpack.c.l.b16 %v1695
    %v1825 = vunpack.c.l.b16 %v1696
    %v1826 = vunpack.c.l.b16 %v1697
    %v1827 = vunpack.c.l.b16 %v1698
    %v1828 = vunpack.c.l.b16 %v1699
    %v1829 = vunpack.c.l.b16 %v1700
    %v1830 = vunpack.c.l.b16 %v1701
    %v1831 = vunpack.c.l.b16 %v1702
    %v1832 = vunpack.c.l.b16 %v1703
    %v1833 = vunpack.c.l.b16 %v1704
    %v1834 = vunpack.c.l.b16 %v1705
    %v1835 = vunpack.c.l.b16 %v1706
    %v1836 = vunpack.c.l.b16 %v1707
    %v1837 = vunpack.c.l.b16 %v1708
    %v1838 = vunpack.c.l.b16 %v1709
    %v1839 = vunpack.c.l.b16 %v1710
    %v1840 = vunpack.c.l.b16 %v1711
    %v1841 = vunpack.c.l.b16 %v1712
    %v1842 = vunpack.c.l.b16 %v1713
    %v1843 = vunpack.c.l.b16 %v1714
    %v1844 = vunpack.c.l.b16 %v1715
    %v1845 = vunpack.c.l.b16 %v1716
    %v1846 = vunpack.c.l.b16 %v1717
    %v1847 = vunpack.c.l.b16 %v1718
    %v1848 = vunpack.c.l.b16 %v1719
    %v1849 = vunpack.c.l.b16 %v1720
    %v1850 = vunpack.c.l.b16 %v1721
    %v1851 = vunpack.c.l.b16 %v1722
    %v1852 = vunpack.c.l.b16 %v1723
    %v1853 = vunpack.c.l.b16 %v1724
    %v1854 = vunpack.c.l.b16 %v1725
    %v1855 = vunpack.c.l.b16 %v1726
    %v1856 = vunpack.c.l.b16 %v1727
    %v1857 = vunpack.c.l.b16 %v1728
    %v1858 = vunpack.c.l.b16 %v1729
    %v1859 = vunpack.c.l.b16 %v1730
    %v1860 = vunpack.c.l.b16 %v1731
    %v1861 = vunpack.c.l.b16 %v1732
    %v1862 = vunpack.c.l.b16 %v1733
    %v1863 = vunpack.c.l.b16 %v1734
    %v1864 = vunpack.c.l.b16 %v1735
    %v1865 = vunpack.c.l.b16 %v1736
    %v1866 = vunpack.c.l.b16 %v1737
    %v1867 = vunpack.c.l.b16 %v1738
    %v1868 = vunpack.c.l.b16 %v1739
    %v1869 = vunpack.c.l.b16 %v1740
    %v1870 = vunpack.c.l.b16 %v1741
    %v1871 = vunpack.c.l.b16 %v1742
    %v1872 = vunpack.c.l.b16 %v1743
    %v1873 = vunpack.c.l.b16 %v1744
    %v1874 = vunpack.c.l.b16 %v1745
    %v1875 = vpack.c.b16 %v1812, %v1811
    %v1876 = vpack.c.b16 %v1814, %v1813
    %v1877 = vpack.c.b16 %v1816, %v1815
    %v1878 = vpack.c.b16 %v1818, %v1817
    %v1879 = vpack.c.b16 %v1820, %v1819
    %v1880 = vpack.c.b16 %v1822, %v1821
    %v1881 = vpack.c.b16 %v1824, %v1823
    %v1882 = vpack.c.b16 %v1826, %v1825
    %v1883 = vpack.c.b16 %v1828, %v1827
    %v1884 = vpack.c.b16 %v1830, %v1829
    %v1885 = vpack.c.b16 %v1832, %v1831
    %v1886 = vpack.c.b16 %v1834, %v1833
    %v1887 = vpack.c.b16 %v1836, %v1835
    %v1888 = vpack.c.b16 %v1838, %v1837
    %v1889 = vpack.c.b16 %v1840, %v1839
    %v1890 = vpack.c.b16 %v1842, %v1841
    %v1891 = vpack.c.b16 %v1844, %v1843
    %v1892 = vpack.c.b16 %v1846, %v1845
    %v1893 = vpack.c.b16 %v1848, %v1847
    %v1894 = vpack.c.b16 %v1850, %v1849
    %v1895 = vpack.c.b16 %v1852, %v1851
    %v1896 = vpack.c.b16 %v1854, %v1853
    %v1897 = vpack.c.b16 %v1856, %v1855
    %v1898 = vpack.c.b16 %v1858, %v1857
    %v1899 = vpack.c.b16 %v1860, %v1859
    %v1900 = vpack.c.b16 %v1862, %v1861
    %v1901 = vpack.c.b16 %v1864, %v1863
    %v1902 = vpack.c.b16 %v1866, %v1865
    %v1903 = vpack.c.b16 %v1868, %v1867
    %v1904 = vpack.c.b16 %v1870, %v1869
    %v1905 = vpack.c.b16 %v1872, %v1871
    %v1906 = vpack.c.b16 %v1874, %v1873
    %1939 = vmatprep.subr.bf16.mxu0 0
    %1940 = vmatpush1.bf16.msra.mxu0 %v1875
    %1941 = vmatprep.subr.bf16.mxu0 0
    %1942 = vmatpush1.bf16.msra.mxu0 %v1876
    %1943 = vmatprep.subr.bf16.mxu0 0
    %1944 = vmatpush1.bf16.msra.mxu0 %v1877
    %1945 = vmatprep.subr.bf16.mxu0 0
    %1946 = vmatpush1.bf16.msra.mxu0 %v1878
    %1947 = vmatprep.subr.bf16.mxu0 0
    %1948 = vmatpush1.bf16.msra.mxu0 %v1879
    %1949 = vmatprep.subr.bf16.mxu0 0
    %1950 = vmatpush1.bf16.msra.mxu0 %v1880
    %1951 = vmatprep.subr.bf16.mxu0 0
    %1952 = vmatpush1.bf16.msra.mxu0 %v1881
    %1953 = vmatprep.subr.bf16.mxu0 0
    %1954 = vmatpush1.bf16.msra.mxu0 %v1882
    %1955 = vmatprep.subr.bf16.mxu0 0
    %1956 = vmatpush1.bf16.msra.mxu0 %v1883
    %1957 = vmatprep.subr.bf16.mxu0 0
    %1958 = vmatpush1.bf16.msra.mxu0 %v1884
    %1959 = vmatprep.subr.bf16.mxu0 0
    %1960 = vmatpush1.bf16.msra.mxu0 %v1885
    %1961 = vmatprep.subr.bf16.mxu0 0
    %1962 = vmatpush1.bf16.msra.mxu0 %v1886
    %1963 = vmatprep.subr.bf16.mxu0 0
    %1964 = vmatpush1.bf16.msra.mxu0 %v1887
    %1965 = vmatprep.subr.bf16.mxu0 0
    %1966 = vmatpush1.bf16.msra.mxu0 %v1888
    %1967 = vmatprep.subr.bf16.mxu0 0
    %1968 = vmatpush1.bf16.msra.mxu0 %v1889
    %1969 = vmatprep.subr.bf16.mxu0 0
    %1970 = vmatpush1.bf16.msra.mxu0 %v1890
    %1971 = vmatprep.mubr.bf16.mxu0 %v1679
    %1972 = vmatmul.mubr.bf16.gmra.mrb[0].mxu0 %v1678
    %v1973 = vpop.f32.mrb[0].mxu0
    %v1974 = vadd.f32 %v1746, %v1973
    %v1975 = vpop.f32.mrb[0].mxu0
    %v1976 = vpop.f32.mrb[0].mxu0
    %v1977 = vpop.f32.mrb[0].mxu0
    %1978 = vdwg.mxu0
    %1979 = vmatprep.subr.bf16.mxu0 0
    %1980 = vmatpush1.bf16.msra.mxu0 %v1891
    %1981 = vmatprep.subr.bf16.mxu0 0
    %1982 = vmatpush1.bf16.msra.mxu0 %v1892
    %1983 = vmatprep.subr.bf16.mxu0 0
    %1984 = vmatpush1.bf16.msra.mxu0 %v1893
    %1985 = vmatprep.subr.bf16.mxu0 0
    %1986 = vmatpush1.bf16.msra.mxu0 %v1894
    %1987 = vmatprep.subr.bf16.mxu0 0
    %1988 = vmatpush1.bf16.msra.mxu0 %v1895
    %1989 = vmatprep.subr.bf16.mxu0 0
    %1990 = vmatpush1.bf16.msra.mxu0 %v1896
    %1991 = vmatprep.subr.bf16.mxu0 0
    %1992 = vmatpush1.bf16.msra.mxu0 %v1897
    %1993 = vmatprep.subr.bf16.mxu0 0
    %1994 = vmatpush1.bf16.msra.mxu0 %v1898
    %1995 = vmatprep.subr.bf16.mxu0 0
    %1996 = vmatpush1.bf16.msra.mxu0 %v1899
    %1997 = vmatprep.subr.bf16.mxu0 0
    %1998 = vmatpush1.bf16.msra.mxu0 %v1900
    %1999 = vmatprep.subr.bf16.mxu0 0
    %2000 = vmatpush1.bf16.msra.mxu0 %v1901
    %2001 = vmatprep.subr.bf16.mxu0 0
    %2002 = vmatpush1.bf16.msra.mxu0 %v1902
    %2003 = vmatprep.subr.bf16.mxu0 0
    %2004 = vmatpush1.bf16.msra.mxu0 %v1903
    %2005 = vmatprep.subr.bf16.mxu0 0
    %2006 = vmatpush1.bf16.msra.mxu0 %v1904
    %2007 = vmatprep.subr.bf16.mxu0 0
    %2008 = vmatpush1.bf16.msra.mxu0 %v1905
    %2009 = vmatprep.subr.bf16.mxu0 0
    %2010 = vmatpush1.bf16.msra.mxu0 %v1906
    %2011 = vmatprep.mubr.bf16.mxu0 %v1681
    %2012 = vmatmul.mubr.bf16.gmra.mrb[0].mxu0 %v1680
    %v2013 = vpop.f32.mrb[0].mxu0
    %v2014 = vadd.f32 %v1974, %v2013
    %v2015 = vpop.f32.mrb[0].mxu0
    %v2016 = vpop.f32.mrb[0].mxu0
    %v2017 = vpop.f32.mrb[0].mxu0
    %2018 = vdwg.mxu0
    %v2019 = vmax.f32 %v2014, 0.0
    %v2020 = vpack.c.bf16 %v2019, %v2019
    %v2021 = vld [vmem:[%s9] sm:$0xf]
    %v2022 = vld [vmem:[%s9 + $0x4] sm:$0xf]
    %v2023 = vld [vmem:[%s9 + $0x8] sm:$0xf]
    %v2024 = vld [vmem:[%s9 + $0xc] sm:$0xf]
    %v2025 = vld [vmem:[%s9 + $0x10] sm:$0xf]
    %v2026 = vld [vmem:[%s9 + $0x14] sm:$0xf]
    %v2027 = vld [vmem:[%s9 + $0x18] sm:$0xf]
    %v2028 = vld [vmem:[%s9 + $0x1c] sm:$0xf]
    %v2029 = vld [vmem:[%s9 + $0x20] sm:$0xf]
    %v2030 = vld [vmem:[%s9 + $0x24] sm:$0xf]
    %v2031 = vld [vmem:[%s9 + $0x28] sm:$0xf]
    %v2032 = vld [vmem:[%s9 + $0x2c] sm:$0xf]
    %v2033 = vld [vmem:[%s9 + $0x30] sm:$0xf]
    %v2034 = vld [vmem:[%s9 + $0x34] sm:$0xf]
    %v2035 = vld [vmem:[%s9 + $0x38] sm:$0xf]
    %v2036 = vld [vmem:[%s9 + $0x3c] sm:$0xf]
    %v2037 = vld [vmem:[%s10] sm:$0x1]
    %v2054 = vunpack.c.l.b16 %v2021
    %v2055 = vunpack.c.l.b16 %v2022
    %v2056 = vunpack.c.l.b16 %v2023
    %v2057 = vunpack.c.l.b16 %v2024
    %v2058 = vunpack.c.l.b16 %v2025
    %v2059 = vunpack.c.l.b16 %v2026
    %v2060 = vunpack.c.l.b16 %v2027
    %v2061 = vunpack.c.l.b16 %v2028
    %v2062 = vunpack.c.l.b16 %v2029
    %v2063 = vunpack.c.l.b16 %v2030
    %v2064 = vunpack.c.l.b16 %v2031
    %v2065 = vunpack.c.l.b16 %v2032
    %v2066 = vunpack.c.l.b16 %v2033
    %v2067 = vunpack.c.l.b16 %v2034
    %v2068 = vunpack.c.l.b16 %v2035
    %v2069 = vunpack.c.l.b16 %v2036
    %v2070 = vpack.c.b16 %v2055, %v2054
    %v2071 = vpack.c.b16 %v2057, %v2056
    %v2072 = vpack.c.b16 %v2059, %v2058
    %v2073 = vpack.c.b16 %v2061, %v2060
    %v2074 = vpack.c.b16 %v2063, %v2062
    %v2075 = vpack.c.b16 %v2065, %v2064
    %v2076 = vpack.c.b16 %v2067, %v2066
    %v2077 = vpack.c.b16 %v2069, %v2068
    %2086 = vmatprep.subr.bf16.mxu0 0
    %2087 = vmatpush1.bf16.msra.mxu0 %v2070
    %2088 = vmatprep.subr.bf16.mxu0 0
    %2089 = vmatpush1.bf16.msra.mxu0 %v2071
    %2090 = vmatprep.subr.bf16.mxu0 0
    %2091 = vmatpush1.bf16.msra.mxu0 %v2072
    %2092 = vmatprep.subr.bf16.mxu0 0
    %2093 = vmatpush1.bf16.msra.mxu0 %v2073
    %2094 = vmatprep.subr.bf16.mxu0 0
    %2095 = vmatpush1.bf16.msra.mxu0 %v2074
    %2096 = vmatprep.subr.bf16.mxu0 0
    %2097 = vmatpush1.bf16.msra.mxu0 %v2075
    %2098 = vmatprep.subr.bf16.mxu0 0
    %2099 = vmatpush1.bf16.msra.mxu0 %v2076
    %2100 = vmatprep.subr.bf16.mxu0 0
    %2101 = vmatpush1.bf16.msra.mxu0 %v2077
    %2102 = vmatprep.subr.bf16.mxu0 0
    %2103 = vmatpush1.bf16.msra.mxu0 0
    %2104 = vmatprep.subr.bf16.mxu0 0
    %2105 = vmatpush1.bf16.msra.mxu0 0
    %2106 = vmatprep.subr.bf16.mxu0 0
    %2107 = vmatpush1.bf16.msra.mxu0 0
    %2108 = vmatprep.subr.bf16.mxu0 0
    %2109 = vmatpush1.bf16.msra.mxu0 0
    %2110 = vmatprep.subr.bf16.mxu0 0
    %2111 = vmatpush1.bf16.msra.mxu0 0
    %2112 = vmatprep.subr.bf16.mxu0 0
    %2113 = vmatpush1.bf16.msra.mxu0 0
    %2114 = vmatprep.subr.bf16.mxu0 0
    %2115 = vmatpush1.bf16.msra.mxu0 0
    %2116 = vmatprep.subr.bf16.mxu0 0
    %2117 = vmatpush1.bf16.msra.mxu0 0
    %2118 = vmatprep.mubr.bf16.mxu0 0
    %2119 = vmatmul.mubr.bf16.gmra.mrb[0].mxu0 %v2020
    %v2120 = vpop.f32.mrb[0].mxu0
    %v2121 = vadd.f32 %v2037, %v2120
    %v2122 = vpop.f32.mrb[0].mxu0
    %v2123 = vpop.f32.mrb[0].mxu0
    %v2124 = vpop.f32.mrb[0].mxu0
    %2125 = vdwg.mxu0
    %v2126 = vmax.f32 %v2121, 0.0
    %v2127 = vpack.c.bf16 %v2126, %v2126
    %v2128 = vld [vmem:[%s11] sm:$0xf]
    %v2129 = vld [vmem:[%s11 + $0x4] sm:$0xf]
    %v2130 = vld [vmem:[%s11 + $0x8] sm:$0xf]
    %v2131 = vld [vmem:[%s11 + $0xc] sm:$0xf]
    %v2132 = vld [vmem:[%s11 + $0x10] sm:$0xf]
    %v2133 = vld [vmem:[%s11 + $0x14] sm:$0xf]
    %v2134 = vld [vmem:[%s11 + $0x18] sm:$0xf]
    %v2135 = vld [vmem:[%s11 + $0x1c] sm:$0xf]
    %v2136 = vld [vmem:[%s12] sm:$0x1]
    %v2145 = vunpack.c.l.b16 %v2128
    %v2146 = vunpack.c.l.b16 %v2129
    %v2147 = vunpack.c.l.b16 %v2130
    %v2148 = vunpack.c.l.b16 %v2131
    %v2149 = vunpack.c.l.b16 %v2132
    %v2150 = vunpack.c.l.b16 %v2133
    %v2151 = vunpack.c.l.b16 %v2134
    %v2152 = vunpack.c.l.b16 %v2135
    %v2153 = vpack.c.b16 %v2146, %v2145
    %v2154 = vpack.c.b16 %v2148, %v2147
    %v2155 = vpack.c.b16 %v2150, %v2149
    %v2156 = vpack.c.b16 %v2152, %v2151
    %v2162 = vsel %vm766, %v2127, 0
    %2164 = vmatprep.subr.bf16.mxu0 0
    %2165 = vmatpush1.bf16.msra.mxu0 %v2153
    %2166 = vmatprep.subr.bf16.mxu0 0
    %2167 = vmatpush1.bf16.msra.mxu0 %v2154
    %2168 = vmatprep.subr.bf16.mxu0 0
    %2169 = vmatpush1.bf16.msra.mxu0 %v2155
    %2170 = vmatprep.subr.bf16.mxu0 0
    %2171 = vmatpush1.bf16.msra.mxu0 %v2156
    %2172 = vmatprep.subr.bf16.mxu0 0
    %2173 = vmatpush1.bf16.msra.mxu0 0
    %2174 = vmatprep.subr.bf16.mxu0 0
    %2175 = vmatpush1.bf16.msra.mxu0 0
    %2176 = vmatprep.subr.bf16.mxu0 0
    %2177 = vmatpush1.bf16.msra.mxu0 0
    %2178 = vmatprep.subr.bf16.mxu0 0
    %2179 = vmatpush1.bf16.msra.mxu0 0
    %2180 = vmatprep.subr.bf16.mxu0 0
    %2181 = vmatpush1.bf16.msra.mxu0 0
    %2182 = vmatprep.subr.bf16.mxu0 0
    %2183 = vmatpush1.bf16.msra.mxu0 0
    %2184 = vmatprep.subr.bf16.mxu0 0
    %2185 = vmatpush1.bf16.msra.mxu0 0
    %2186 = vmatprep.subr.bf16.mxu0 0
    %2187 = vmatpush1.bf16.msra.mxu0 0
    %2188 = vmatprep.subr.bf16.mxu0 0
    %2189 = vmatpush1.bf16.msra.mxu0 0
    %2190 = vmatprep.subr.bf16.mxu0 0
    %2191 = vmatpush1.bf16.msra.mxu0 0
    %2192 = vmatprep.subr.bf16.mxu0 0
    %2193 = vmatpush1.bf16.msra.mxu0 0
    %2194 = vmatprep.subr.bf16.mxu0 0
    %2195 = vmatpush1.bf16.msra.mxu0 0
    %2196 = vmatprep.mubr.bf16.mxu0 0
    %2197 = vmatmul.mubr.bf16.gmra.mrb[0].mxu0 %v2162
    %v2198 = vpop.f32.mrb[0].mxu0
    %v2199 = vadd.f32 %v2136, %v2198
    %v2200 = vpop.f32.mrb[0].mxu0
    %v2201 = vpop.f32.mrb[0].mxu0
    %v2202 = vpop.f32.mrb[0].mxu0
    %2203 = vdwg.mxu0
    %2204 = vst [vmem:[#allocation2] sm:$0x1] %v2199
    // Predicated region
    $region54: #{simple_cnn_forward.1} parent=1 // pred_check
      _
    $region55: #{simple_cnn_forward.1} parent=1 // pred_check_branch
      %2206 = sbr.rel (0) target = $region57
    $region56: #{simple_cnn_forward.1} parent=1 // pred_region
      %s2208 = ssub.s32 16, 16
      %2209 = vsyncadd [#allocation3], %s2208
      %s2211 = sshll.u32 [#allocation2], 4
      %s2212 = int_to_ptr.vmem [resolvable:$true] %s2211
      %2214 = dma.vmem_to_hbm [thread:$0]  %s2212, 16, %s13, [#allocation3]
    $region57: #{simple_cnn_forward.1} parent=1 // pred_fallthru
      _
    // Predicated region
    $region58: #{simple_cnn_forward.1} parent=1 // pred_check
      _
    $region59: #{simple_cnn_forward.1} parent=1 // pred_check_branch
      %2216 = sbr.rel (0) target = $region61
    $region60: #{simple_cnn_forward.1} parent=1 // pred_region
      %2217 = dma.done [#allocation3], 16
    $region61: #{simple_cnn_forward.1} parent=1 // pred_fallthru
      _
    %2218 = vsyncpa [#allocation3], 1

</llo_original>
